<compile_context>
chip_gen: v6e
topology: v6e:2x2x1
jax: 0.10.0
libtpu: 0.0.40
codegen_flags: <defaults>
</compile_context>

<pallas_src>
import jax
import jax.numpy as jnp
from jax.experimental import pallas as pl
from jax.experimental.pallas import tpu as pltpu

# ---------------- config (small, consistent with the module) ----------------
B = 2          # batch
L = 8          # sequence length
C = 32         # embed dim ("c" in the module)
H = 4          # heads
HD = C // H    # head dim
BL = B * L     # folded M dimension
EPS = 1e-5     # nn.LayerNorm default eps


def _attn_kernel(x_ref, gamma_ref, beta_ref, w_qkv_ref, b_qkv_ref,
                 w_out_ref, b_out_ref, o_ref):
    # Single grid step: x_ref is the whole (B*L, C) slab.
    x = x_ref[...]                                   # (BL, C) f32

    # ---- LayerNorm over C (biased variance, like torch.nn.LayerNorm) ----
    mean = jnp.mean(x, axis=-1, keepdims=True)
    xc = x - mean
    var = jnp.mean(xc * xc, axis=-1, keepdims=True)
    h = xc * jax.lax.rsqrt(var + EPS) * gamma_ref[0] + beta_ref[0]   # (BL, C) f32

    # ---- fused QKV projection: one MXU push, bf16 operands, f32 accumulation ----
    qkv = jnp.dot(h.astype(jnp.bfloat16), w_qkv_ref[...],
                  preferred_element_type=jnp.float32) + b_qkv_ref[0]  # (BL, 3C) f32

    scale = 1.0 / (HD ** 0.5)
    # Hoist the softmax scale into q; split batch back out for batched attention.
    q = (qkv[:, 0 * C:1 * C] * scale).reshape(B, L, C).astype(jnp.bfloat16)
    k = qkv[:, 1 * C:2 * C].reshape(B, L, C).astype(jnp.bfloat16)
    v = qkv[:, 2 * C:3 * C].reshape(B, L, C).astype(jnp.bfloat16)

    w_out = w_out_ref[...]                            # (C, C) bf16, already transposed

    # ---- per-head attention (batched over B) with fused out-projection ----
    y = jnp.zeros((BL, C), jnp.float32)
    for hh in range(H):                               # static unroll, H = 4
        s = hh * HD
        qh = q[:, :, s:s + HD]                        # (B, L, HD) bf16
        kh = k[:, :, s:s + HD]                        # (B, L, HD) bf16
        vh = v[:, :, s:s + HD]                        # (B, L, HD) bf16

        sc = jnp.einsum('bld,bmd->blm', qh, kh,
                        preferred_element_type=jnp.float32)           # (B, L, L) f32
        m = jnp.max(sc, axis=-1, keepdims=True)
        p = jnp.exp(sc - m)
        p = p * pl.reciprocal(jnp.sum(p, axis=-1, keepdims=True), approx=True)

        ctx = jnp.einsum('blm,bmd->bld', p.astype(jnp.bfloat16), vh,
                         preferred_element_type=jnp.float32)          # (B, L, HD) f32

        # Fold this head's contribution of the out-projection directly into y
        # (eliminates the lane-axis concatenate of head outputs).
        y = y + jnp.dot(ctx.reshape(BL, HD).astype(jnp.bfloat16),
                        w_out[s:s + HD, :],
                        preferred_element_type=jnp.float32)           # (BL, C) f32

    y = y + b_out_ref[0]

    # ---- residual ----
    o_ref[...] = x + y


def self_attention_block(x, gamma, beta, w_in, b_in, w_out, b_out):
    """x: (B, L, C) fp32 -> (B, L, C) fp32.  Weights follow nn.MultiheadAttention layout."""
    Bn, Ln, Cn = x.shape
    bl = Bn * Ln

    # Layout plumbing done once in the wrapper (free): fold batch, transpose weights,
    # cast matmul operands to bf16.  Elementwise params stay f32.
    x2 = x.reshape(bl, Cn)
    gamma2 = gamma.reshape(1, Cn).astype(jnp.float32)
    beta2 = beta.reshape(1, Cn).astype(jnp.float32)
    w_qkv_t = w_in.T.astype(jnp.bfloat16)             # (C, 3C)
    b_in2 = b_in.reshape(1, 3 * Cn).astype(jnp.float32)
    w_out_t = w_out.T.astype(jnp.bfloat16)            # (C, C)
    b_out2 = b_out.reshape(1, Cn).astype(jnp.float32)

    full = lambda i: (0, 0)
    out2 = pl.pallas_call(
        _attn_kernel,
        out_shape=jax.ShapeDtypeStruct((bl, Cn), jnp.float32),
        grid_spec=pltpu.PrefetchScalarGridSpec(
            num_scalar_prefetch=0,
            grid=(1,),                                 # single step: work is tiny, grid was pure overhead
            in_specs=[
                pl.BlockSpec((bl, Cn), full),          # x (batch folded into rows)
                pl.BlockSpec((1, Cn), full),           # gamma
                pl.BlockSpec((1, Cn), full),           # beta
                pl.BlockSpec((Cn, 3 * Cn), full),      # in_proj_weight^T  (bf16)
                pl.BlockSpec((1, 3 * Cn), full),       # in_proj_bias
                pl.BlockSpec((Cn, Cn), full),          # out_proj.weight^T (bf16)
                pl.BlockSpec((1, Cn), full),           # out_proj.bias
            ],
            out_specs=pl.BlockSpec((bl, Cn), full),
        ),
        compiler_params=pltpu.CompilerParams(
            dimension_semantics=("arbitrary",)),       # no cross-TC split of tiny work
    )(x2, gamma2, beta2, w_qkv_t, b_in2, w_out_t, b_out2)
    return out2.reshape(Bn, Ln, Cn)
    # TODO(synk): C=32 keeps lane occupancy at 25%; pad C to 128 only if the real model allows.


# ---------------- pure-JAX f32 reference (for a sanity check) ----------------
def _ref(x, gamma, beta, w_in, b_in, w_out, b_out):
    mean = jnp.mean(x, axis=-1, keepdims=True)
    xc = x - mean
    var = jnp.mean(xc * xc, axis=-1, keepdims=True)
    h = xc * jax.lax.rsqrt(var + EPS) * gamma + beta
    qkv = jnp.einsum("blc,dc->bld", h, w_in) + b_in
    q, k, v = qkv[..., :C], qkv[..., C:2 * C], qkv[..., 2 * C:]
    def split(t):  # (B,L,C) -> (B,H,L,HD)
        return t.reshape(B, L, H, HD).transpose(0, 2, 1, 3)
    qh, kh, vh = split(q), split(k), split(v)
    scores = jnp.einsum("bhld,bhmd->bhlm", qh, kh) / (HD ** 0.5)
    p = jax.nn.softmax(scores, axis=-1)
    o = jnp.einsum("bhlm,bhmd->bhld", p, vh).transpose(0, 2, 1, 3).reshape(B, L, C)
    y = jnp.einsum("blc,dc->bld", o, w_out) + b_out
    return x + y


if __name__ == "__main__":
    key = jax.random.PRNGKey(0)
    kx, kw1, kw2, kb1, kb2 = jax.random.split(key, 5)

    x = jax.random.normal(kx, (B, L, C), dtype=jnp.float32)

    # Deterministic synthetic parameters (shapes follow nn.LayerNorm / nn.MultiheadAttention).
    gamma = jnp.ones((C,), dtype=jnp.float32)
    beta = jnp.zeros((C,), dtype=jnp.float32)
    w_in = jax.random.normal(kw1, (3 * C, C), dtype=jnp.float32) * 0.1   # in_proj_weight
    b_in = jax.random.normal(kb1, (3 * C,), dtype=jnp.float32) * 0.1     # in_proj_bias
    w_out = jax.random.normal(kw2, (C, C), dtype=jnp.float32) * 0.1      # out_proj.weight
    b_out = jax.random.normal(kb2, (C,), dtype=jnp.float32) * 0.1        # out_proj.bias

    out = self_attention_block(x, gamma, beta, w_in, b_in, w_out, b_out)
    out = jax.block_until_ready(out)

    ref = _ref(x, gamma, beta, w_in, b_in, w_out, b_out)
    assert out.shape == (B, L, C)
    # bf16 MXU operands (f32 accumulation) -> loosened tolerance vs f32 reference.
    assert jnp.allclose(out, ref, atol=3e-2, rtol=3e-2), "mismatch vs reference"

    print("KERNEL_OK")
</pallas_src>

<mosaic_0001>
module attributes {stable_mosaic.version = 11 : i64} {
  func.func @_attn_kernel(%arg0: i32, %arg1: memref<16x32xf32, #tpu.memory_space<vmem>>, %arg2: memref<1x32xf32, #tpu.memory_space<vmem>>, %arg3: memref<1x32xf32, #tpu.memory_space<vmem>>, %arg4: memref<32x96xbf16, #tpu.memory_space<vmem>>, %arg5: memref<1x96xf32, #tpu.memory_space<vmem>>, %arg6: memref<32x32xbf16, #tpu.memory_space<vmem>>, %arg7: memref<1x32xf32, #tpu.memory_space<vmem>>, %arg8: memref<16x32xf32, #tpu.memory_space<vmem>>) attributes {dimension_semantics = [#tpu.dimension_semantics<arbitrary>], iteration_bounds = array<i64: 1>, scalar_prefetch = 0 : i64, scratch_operands = 0 : i64, tpu.core_type = #tpu.core_type<tc>, window_params = [{pipeline_mode = #tpu.pipeline_mode<synchronous>, transform_indices = @transform_0, window_bounds = array<i64: 16, 32>}, {pipeline_mode = #tpu.pipeline_mode<synchronous>, transform_indices = @transform_1, window_bounds = array<i64: 1, 32>}, {pipeline_mode = #tpu.pipeline_mode<synchronous>, transform_indices = @transform_2, window_bounds = array<i64: 1, 32>}, {pipeline_mode = #tpu.pipeline_mode<synchronous>, transform_indices = @transform_3, window_bounds = array<i64: 32, 96>}, {pipeline_mode = #tpu.pipeline_mode<synchronous>, transform_indices = @transform_4, window_bounds = array<i64: 1, 96>}, {pipeline_mode = #tpu.pipeline_mode<synchronous>, transform_indices = @transform_5, window_bounds = array<i64: 32, 32>}, {pipeline_mode = #tpu.pipeline_mode<synchronous>, transform_indices = @transform_6, window_bounds = array<i64: 1, 32>}, {pipeline_mode = #tpu.pipeline_mode<synchronous>, transform_indices = @transform_7, window_bounds = array<i64: 16, 32>}]} {
    %c0 = arith.constant 0 : index
    %c0_0 = arith.constant 0 : index
    %0 = vector.load %arg1[%c0, %c0_0] : memref<16x32xf32, #tpu.memory_space<vmem>>, vector<16x32xf32>
    %cst = arith.constant dense<0.000000e+00> : vector<16xf32>
    %1 = vector.multi_reduction <add>, %0, %cst [1] : vector<16x32xf32> to vector<16xf32>
    %2 = vector.shape_cast %1 : vector<16xf32> to vector<16x1xf32>
    %cst_1 = arith.constant 3.200000e+01 : f32
    %3 = vector.broadcast %cst_1 : f32 to vector<16x1xf32>
    %4 = arith.divf %2, %3 : vector<16x1xf32>
    %5 = vector.broadcast %4 : vector<16x1xf32> to vector<16x32xf32>
    %6 = arith.subf %0, %5 : vector<16x32xf32>
    %7 = arith.mulf %6, %6 : vector<16x32xf32>
    %cst_2 = arith.constant dense<0.000000e+00> : vector<16xf32>
    %8 = vector.multi_reduction <add>, %7, %cst_2 [1] : vector<16x32xf32> to vector<16xf32>
    %9 = vector.shape_cast %8 : vector<16xf32> to vector<16x1xf32>
    %cst_3 = arith.constant 3.200000e+01 : f32
    %10 = vector.broadcast %cst_3 : f32 to vector<16x1xf32>
    %11 = arith.divf %9, %10 : vector<16x1xf32>
    %cst_4 = arith.constant 9.99999974E-6 : f32
    %12 = vector.broadcast %cst_4 : f32 to vector<16x1xf32>
    %13 = arith.addf %11, %12 : vector<16x1xf32>
    %14 = math.rsqrt %13 : vector<16x1xf32>
    %15 = vector.broadcast %14 : vector<16x1xf32> to vector<16x32xf32>
    %16 = arith.mulf %6, %15 : vector<16x32xf32>
    %c0_5 = arith.constant 0 : index
    %c0_6 = arith.constant 0 : index
    %17 = vector.load %arg2[%c0_5, %c0_6] : memref<1x32xf32, #tpu.memory_space<vmem>>, vector<1x32xf32>
    %18 = vector.shape_cast %17 : vector<1x32xf32> to vector<32xf32>
    %19 = vector.shape_cast %18 : vector<32xf32> to vector<1x32xf32>
    %20 = vector.broadcast %19 : vector<1x32xf32> to vector<16x32xf32>
    %21 = arith.mulf %16, %20 : vector<16x32xf32>
    %c0_7 = arith.constant 0 : index
    %c0_8 = arith.constant 0 : index
    %22 = vector.load %arg3[%c0_7, %c0_8] : memref<1x32xf32, #tpu.memory_space<vmem>>, vector<1x32xf32>
    %23 = vector.shape_cast %22 : vector<1x32xf32> to vector<32xf32>
    %24 = vector.shape_cast %23 : vector<32xf32> to vector<1x32xf32>
    %25 = vector.broadcast %24 : vector<1x32xf32> to vector<16x32xf32>
    %26 = arith.addf %21, %25 : vector<16x32xf32>
    %27 = arith.truncf %26 : vector<16x32xf32> to vector<16x32xbf16>
    %c0_9 = arith.constant 0 : index
    %c0_10 = arith.constant 0 : index
    %28 = vector.load %arg4[%c0_9, %c0_10] : memref<32x96xbf16, #tpu.memory_space<vmem>>, vector<32x96xbf16>
    %cst_11 = arith.constant dense<0.000000e+00> : vector<16x96xf32>
    %29 = tpu.matmul %27, %28, %cst_11 {dimension_numbers = #tpu.dot_dimension_numbers<[1], [0], [0], [1], [0, 0, 1, 1], [], []>} : vector<16x32xbf16>, vector<32x96xbf16>, vector<16x96xf32> -> vector<16x96xf32>
    %c0_12 = arith.constant 0 : index
    %c0_13 = arith.constant 0 : index
    %30 = vector.load %arg5[%c0_12, %c0_13] : memref<1x96xf32, #tpu.memory_space<vmem>>, vector<1x96xf32>
    %31 = vector.shape_cast %30 : vector<1x96xf32> to vector<96xf32>
    %32 = vector.shape_cast %31 : vector<96xf32> to vector<1x96xf32>
    %33 = vector.broadcast %32 : vector<1x96xf32> to vector<16x96xf32>
    %34 = arith.addf %29, %33 : vector<16x96xf32>
    %35 = vector.extract_strided_slice %34 {offsets = [0, 0], sizes = [16, 32], strides = [1, 1]} : vector<16x96xf32> to vector<16x32xf32>
    %cst_14 = arith.constant 0.353553385 : f32
    %36 = vector.broadcast %cst_14 : f32 to vector<16x32xf32>
    %37 = arith.mulf %35, %36 : vector<16x32xf32>
    %38 = vector.shape_cast %37 : vector<16x32xf32> to vector<2x8x32xf32>
    %39 = arith.truncf %38 : vector<2x8x32xf32> to vector<2x8x32xbf16>
    %40 = vector.extract_strided_slice %34 {offsets = [0, 32], sizes = [16, 32], strides = [1, 1]} : vector<16x96xf32> to vector<16x32xf32>
    %41 = vector.shape_cast %40 : vector<16x32xf32> to vector<2x8x32xf32>
    %42 = arith.truncf %41 : vector<2x8x32xf32> to vector<2x8x32xbf16>
    %43 = vector.extract_strided_slice %34 {offsets = [0, 64], sizes = [16, 32], strides = [1, 1]} : vector<16x96xf32> to vector<16x32xf32>
    %44 = vector.shape_cast %43 : vector<16x32xf32> to vector<2x8x32xf32>
    %45 = arith.truncf %44 : vector<2x8x32xf32> to vector<2x8x32xbf16>
    %c0_15 = arith.constant 0 : index
    %c0_16 = arith.constant 0 : index
    %46 = vector.load %arg6[%c0_15, %c0_16] : memref<32x32xbf16, #tpu.memory_space<vmem>>, vector<32x32xbf16>
    %cst_17 = arith.constant 0.000000e+00 : f32
    %47 = vector.broadcast %cst_17 : f32 to vector<16x32xf32>
    %48 = vector.extract_strided_slice %39 {offsets = [0, 0, 0], sizes = [2, 8, 8], strides = [1, 1, 1]} : vector<2x8x32xbf16> to vector<2x8x8xbf16>
    %49 = vector.extract_strided_slice %42 {offsets = [0, 0, 0], sizes = [2, 8, 8], strides = [1, 1, 1]} : vector<2x8x32xbf16> to vector<2x8x8xbf16>
    %50 = vector.extract_strided_slice %45 {offsets = [0, 0, 0], sizes = [2, 8, 8], strides = [1, 1, 1]} : vector<2x8x32xbf16> to vector<2x8x8xbf16>
    "tpu.trace_start"() <{level = 10 : i32, message = "bld,bmd->blm"}> : () -> ()
    %cst_18 = arith.constant dense<0.000000e+00> : vector<2x8x8xf32>
    %51 = tpu.matmul %48, %49, %cst_18 {dimension_numbers = #tpu.dot_dimension_numbers<[2], [2], [1], [1], [0, 0, 0, 1, 1, 1], [0], [0]>} : vector<2x8x8xbf16>, vector<2x8x8xbf16>, vector<2x8x8xf32> -> vector<2x8x8xf32>
    "tpu.trace_stop"() : () -> ()
    %cst_19 = arith.constant dense<0xFF800000> : vector<2x8xf32>
    %52 = vector.multi_reduction <maximumf>, %51, %cst_19 [2] : vector<2x8x8xf32> to vector<2x8xf32>
    %53 = vector.shape_cast %52 : vector<2x8xf32> to vector<2x8x1xf32>
    %54 = vector.broadcast %53 : vector<2x8x1xf32> to vector<2x8x8xf32>
    %55 = arith.subf %51, %54 : vector<2x8x8xf32>
    %56 = math.exp %55 : vector<2x8x8xf32>
    %cst_20 = arith.constant dense<0.000000e+00> : vector<2x8xf32>
    %57 = vector.multi_reduction <add>, %56, %cst_20 [2] : vector<2x8x8xf32> to vector<2x8xf32>
    %58 = vector.shape_cast %57 : vector<2x8xf32> to vector<2x8x1xf32>
    %59 = tpu.reciprocal %58 {approx = true} : vector<2x8x1xf32> -> vector<2x8x1xf32>
    %60 = vector.broadcast %59 : vector<2x8x1xf32> to vector<2x8x8xf32>
    %61 = arith.mulf %56, %60 : vector<2x8x8xf32>
    %62 = arith.truncf %61 : vector<2x8x8xf32> to vector<2x8x8xbf16>
    "tpu.trace_start"() <{level = 10 : i32, message = "blm,bmd->bld"}> : () -> ()
    %cst_21 = arith.constant dense<0.000000e+00> : vector<2x8x8xf32>
    %63 = tpu.matmul %62, %50, %cst_21 {dimension_numbers = #tpu.dot_dimension_numbers<[2], [1], [1], [2], [0, 0, 0, 1, 1, 2], [0], [0]>} : vector<2x8x8xbf16>, vector<2x8x8xbf16>, vector<2x8x8xf32> -> vector<2x8x8xf32>
    "tpu.trace_stop"() : () -> ()
    %64 = vector.shape_cast %63 : vector<2x8x8xf32> to vector<16x8xf32>
    %65 = arith.truncf %64 : vector<16x8xf32> to vector<16x8xbf16>
    %66 = vector.extract_strided_slice %46 {offsets = [0, 0], sizes = [8, 32], strides = [1, 1]} : vector<32x32xbf16> to vector<8x32xbf16>
    %cst_22 = arith.constant dense<0.000000e+00> : vector<16x32xf32>
    %67 = tpu.matmul %65, %66, %cst_22 {dimension_numbers = #tpu.dot_dimension_numbers<[1], [0], [0], [1], [0, 0, 1, 1], [], []>} : vector<16x8xbf16>, vector<8x32xbf16>, vector<16x32xf32> -> vector<16x32xf32>
    %68 = arith.addf %47, %67 : vector<16x32xf32>
    %69 = vector.extract_strided_slice %39 {offsets = [0, 0, 8], sizes = [2, 8, 8], strides = [1, 1, 1]} : vector<2x8x32xbf16> to vector<2x8x8xbf16>
    %70 = vector.extract_strided_slice %42 {offsets = [0, 0, 8], sizes = [2, 8, 8], strides = [1, 1, 1]} : vector<2x8x32xbf16> to vector<2x8x8xbf16>
    %71 = vector.extract_strided_slice %45 {offsets = [0, 0, 8], sizes = [2, 8, 8], strides = [1, 1, 1]} : vector<2x8x32xbf16> to vector<2x8x8xbf16>
    "tpu.trace_start"() <{level = 10 : i32, message = "bld,bmd->blm"}> : () -> ()
    %cst_23 = arith.constant dense<0.000000e+00> : vector<2x8x8xf32>
    %72 = tpu.matmul %69, %70, %cst_23 {dimension_numbers = #tpu.dot_dimension_numbers<[2], [2], [1], [1], [0, 0, 0, 1, 1, 1], [0], [0]>} : vector<2x8x8xbf16>, vector<2x8x8xbf16>, vector<2x8x8xf32> -> vector<2x8x8xf32>
    "tpu.trace_stop"() : () -> ()
    %cst_24 = arith.constant dense<0xFF800000> : vector<2x8xf32>
    %73 = vector.multi_reduction <maximumf>, %72, %cst_24 [2] : vector<2x8x8xf32> to vector<2x8xf32>
    %74 = vector.shape_cast %73 : vector<2x8xf32> to vector<2x8x1xf32>
    %75 = vector.broadcast %74 : vector<2x8x1xf32> to vector<2x8x8xf32>
    %76 = arith.subf %72, %75 : vector<2x8x8xf32>
    %77 = math.exp %76 : vector<2x8x8xf32>
    %cst_25 = arith.constant dense<0.000000e+00> : vector<2x8xf32>
    %78 = vector.multi_reduction <add>, %77, %cst_25 [2] : vector<2x8x8xf32> to vector<2x8xf32>
    %79 = vector.shape_cast %78 : vector<2x8xf32> to vector<2x8x1xf32>
    %80 = tpu.reciprocal %79 {approx = true} : vector<2x8x1xf32> -> vector<2x8x1xf32>
    %81 = vector.broadcast %80 : vector<2x8x1xf32> to vector<2x8x8xf32>
    %82 = arith.mulf %77, %81 : vector<2x8x8xf32>
    %83 = arith.truncf %82 : vector<2x8x8xf32> to vector<2x8x8xbf16>
    "tpu.trace_start"() <{level = 10 : i32, message = "blm,bmd->bld"}> : () -> ()
    %cst_26 = arith.constant dense<0.000000e+00> : vector<2x8x8xf32>
    %84 = tpu.matmul %83, %71, %cst_26 {dimension_numbers = #tpu.dot_dimension_numbers<[2], [1], [1], [2], [0, 0, 0, 1, 1, 2], [0], [0]>} : vector<2x8x8xbf16>, vector<2x8x8xbf16>, vector<2x8x8xf32> -> vector<2x8x8xf32>
    "tpu.trace_stop"() : () -> ()
    %85 = vector.shape_cast %84 : vector<2x8x8xf32> to vector<16x8xf32>
    %86 = arith.truncf %85 : vector<16x8xf32> to vector<16x8xbf16>
    %87 = vector.extract_strided_slice %46 {offsets = [8, 0], sizes = [8, 32], strides = [1, 1]} : vector<32x32xbf16> to vector<8x32xbf16>
    %cst_27 = arith.constant dense<0.000000e+00> : vector<16x32xf32>
    %88 = tpu.matmul %86, %87, %cst_27 {dimension_numbers = #tpu.dot_dimension_numbers<[1], [0], [0], [1], [0, 0, 1, 1], [], []>} : vector<16x8xbf16>, vector<8x32xbf16>, vector<16x32xf32> -> vector<16x32xf32>
    %89 = arith.addf %68, %88 : vector<16x32xf32>
    %90 = vector.extract_strided_slice %39 {offsets = [0, 0, 16], sizes = [2, 8, 8], strides = [1, 1, 1]} : vector<2x8x32xbf16> to vector<2x8x8xbf16>
    %91 = vector.extract_strided_slice %42 {offsets = [0, 0, 16], sizes = [2, 8, 8], strides = [1, 1, 1]} : vector<2x8x32xbf16> to vector<2x8x8xbf16>
    %92 = vector.extract_strided_slice %45 {offsets = [0, 0, 16], sizes = [2, 8, 8], strides = [1, 1, 1]} : vector<2x8x32xbf16> to vector<2x8x8xbf16>
    "tpu.trace_start"() <{level = 10 : i32, message = "bld,bmd->blm"}> : () -> ()
    %cst_28 = arith.constant dense<0.000000e+00> : vector<2x8x8xf32>
    %93 = tpu.matmul %90, %91, %cst_28 {dimension_numbers = #tpu.dot_dimension_numbers<[2], [2], [1], [1], [0, 0, 0, 1, 1, 1], [0], [0]>} : vector<2x8x8xbf16>, vector<2x8x8xbf16>, vector<2x8x8xf32> -> vector<2x8x8xf32>
    "tpu.trace_stop"() : () -> ()
    %cst_29 = arith.constant dense<0xFF800000> : vector<2x8xf32>
    %94 = vector.multi_reduction <maximumf>, %93, %cst_29 [2] : vector<2x8x8xf32> to vector<2x8xf32>
    %95 = vector.shape_cast %94 : vector<2x8xf32> to vector<2x8x1xf32>
    %96 = vector.broadcast %95 : vector<2x8x1xf32> to vector<2x8x8xf32>
    %97 = arith.subf %93, %96 : vector<2x8x8xf32>
    %98 = math.exp %97 : vector<2x8x8xf32>
    %cst_30 = arith.constant dense<0.000000e+00> : vector<2x8xf32>
    %99 = vector.multi_reduction <add>, %98, %cst_30 [2] : vector<2x8x8xf32> to vector<2x8xf32>
    %100 = vector.shape_cast %99 : vector<2x8xf32> to vector<2x8x1xf32>
    %101 = tpu.reciprocal %100 {approx = true} : vector<2x8x1xf32> -> vector<2x8x1xf32>
    %102 = vector.broadcast %101 : vector<2x8x1xf32> to vector<2x8x8xf32>
    %103 = arith.mulf %98, %102 : vector<2x8x8xf32>
    %104 = arith.truncf %103 : vector<2x8x8xf32> to vector<2x8x8xbf16>
    "tpu.trace_start"() <{level = 10 : i32, message = "blm,bmd->bld"}> : () -> ()
    %cst_31 = arith.constant dense<0.000000e+00> : vector<2x8x8xf32>
    %105 = tpu.matmul %104, %92, %cst_31 {dimension_numbers = #tpu.dot_dimension_numbers<[2], [1], [1], [2], [0, 0, 0, 1, 1, 2], [0], [0]>} : vector<2x8x8xbf16>, vector<2x8x8xbf16>, vector<2x8x8xf32> -> vector<2x8x8xf32>
    "tpu.trace_stop"() : () -> ()
    %106 = vector.shape_cast %105 : vector<2x8x8xf32> to vector<16x8xf32>
    %107 = arith.truncf %106 : vector<16x8xf32> to vector<16x8xbf16>
    %108 = vector.extract_strided_slice %46 {offsets = [16, 0], sizes = [8, 32], strides = [1, 1]} : vector<32x32xbf16> to vector<8x32xbf16>
    %cst_32 = arith.constant dense<0.000000e+00> : vector<16x32xf32>
    %109 = tpu.matmul %107, %108, %cst_32 {dimension_numbers = #tpu.dot_dimension_numbers<[1], [0], [0], [1], [0, 0, 1, 1], [], []>} : vector<16x8xbf16>, vector<8x32xbf16>, vector<16x32xf32> -> vector<16x32xf32>
    %110 = arith.addf %89, %109 : vector<16x32xf32>
    %111 = vector.extract_strided_slice %39 {offsets = [0, 0, 24], sizes = [2, 8, 8], strides = [1, 1, 1]} : vector<2x8x32xbf16> to vector<2x8x8xbf16>
    %112 = vector.extract_strided_slice %42 {offsets = [0, 0, 24], sizes = [2, 8, 8], strides = [1, 1, 1]} : vector<2x8x32xbf16> to vector<2x8x8xbf16>
    %113 = vector.extract_strided_slice %45 {offsets = [0, 0, 24], sizes = [2, 8, 8], strides = [1, 1, 1]} : vector<2x8x32xbf16> to vector<2x8x8xbf16>
    "tpu.trace_start"() <{level = 10 : i32, message = "bld,bmd->blm"}> : () -> ()
    %cst_33 = arith.constant dense<0.000000e+00> : vector<2x8x8xf32>
    %114 = tpu.matmul %111, %112, %cst_33 {dimension_numbers = #tpu.dot_dimension_numbers<[2], [2], [1], [1], [0, 0, 0, 1, 1, 1], [0], [0]>} : vector<2x8x8xbf16>, vector<2x8x8xbf16>, vector<2x8x8xf32> -> vector<2x8x8xf32>
    "tpu.trace_stop"() : () -> ()
    %cst_34 = arith.constant dense<0xFF800000> : vector<2x8xf32>
    %115 = vector.multi_reduction <maximumf>, %114, %cst_34 [2] : vector<2x8x8xf32> to vector<2x8xf32>
    %116 = vector.shape_cast %115 : vector<2x8xf32> to vector<2x8x1xf32>
    %117 = vector.broadcast %116 : vector<2x8x1xf32> to vector<2x8x8xf32>
    %118 = arith.subf %114, %117 : vector<2x8x8xf32>
    %119 = math.exp %118 : vector<2x8x8xf32>
    %cst_35 = arith.constant dense<0.000000e+00> : vector<2x8xf32>
    %120 = vector.multi_reduction <add>, %119, %cst_35 [2] : vector<2x8x8xf32> to vector<2x8xf32>
    %121 = vector.shape_cast %120 : vector<2x8xf32> to vector<2x8x1xf32>
    %122 = tpu.reciprocal %121 {approx = true} : vector<2x8x1xf32> -> vector<2x8x1xf32>
    %123 = vector.broadcast %122 : vector<2x8x1xf32> to vector<2x8x8xf32>
    %124 = arith.mulf %119, %123 : vector<2x8x8xf32>
    %125 = arith.truncf %124 : vector<2x8x8xf32> to vector<2x8x8xbf16>
    "tpu.trace_start"() <{level = 10 : i32, message = "blm,bmd->bld"}> : () -> ()
    %cst_36 = arith.constant dense<0.000000e+00> : vector<2x8x8xf32>
    %126 = tpu.matmul %125, %113, %cst_36 {dimension_numbers = #tpu.dot_dimension_numbers<[2], [1], [1], [2], [0, 0, 0, 1, 1, 2], [0], [0]>} : vector<2x8x8xbf16>, vector<2x8x8xbf16>, vector<2x8x8xf32> -> vector<2x8x8xf32>
    "tpu.trace_stop"() : () -> ()
    %127 = vector.shape_cast %126 : vector<2x8x8xf32> to vector<16x8xf32>
    %128 = arith.truncf %127 : vector<16x8xf32> to vector<16x8xbf16>
    %129 = vector.extract_strided_slice %46 {offsets = [24, 0], sizes = [8, 32], strides = [1, 1]} : vector<32x32xbf16> to vector<8x32xbf16>
    %cst_37 = arith.constant dense<0.000000e+00> : vector<16x32xf32>
    %130 = tpu.matmul %128, %129, %cst_37 {dimension_numbers = #tpu.dot_dimension_numbers<[1], [0], [0], [1], [0, 0, 1, 1], [], []>} : vector<16x8xbf16>, vector<8x32xbf16>, vector<16x32xf32> -> vector<16x32xf32>
    %131 = arith.addf %110, %130 : vector<16x32xf32>
    %c0_38 = arith.constant 0 : index
    %c0_39 = arith.constant 0 : index
    %132 = vector.load %arg7[%c0_38, %c0_39] : memref<1x32xf32, #tpu.memory_space<vmem>>, vector<1x32xf32>
    %133 = vector.shape_cast %132 : vector<1x32xf32> to vector<32xf32>
    %134 = vector.shape_cast %133 : vector<32xf32> to vector<1x32xf32>
    %135 = vector.broadcast %134 : vector<1x32xf32> to vector<16x32xf32>
    %136 = arith.addf %131, %135 : vector<16x32xf32>
    %137 = arith.addf %0, %136 : vector<16x32xf32>
    %c0_40 = arith.constant 0 : index
    %c0_41 = arith.constant 0 : index
    %138 = vector.load %arg8[%c0_40, %c0_41] : memref<16x32xf32, #tpu.memory_space<vmem>>, vector<16x32xf32>
    tpu.vector_store %arg8[%c0_40, %c0_41], %137 {strides = array<i32>} : memref<16x32xf32, #tpu.memory_space<vmem>>, vector<16x32xf32>,
    return
  }
  func.func @transform_0(%arg0: i32) -> (i32, i32) {
    %c0_i32 = arith.constant 0 : i32
    %c0_i32_0 = arith.constant 0 : i32
    %c0_i32_1 = arith.constant 0 : i32
    return %c0_i32, %c0_i32_0 : i32, i32
  }
  func.func @transform_1(%arg0: i32) -> (i32, i32) {
    %c0_i32 = arith.constant 0 : i32
    %c0_i32_0 = arith.constant 0 : i32
    %c0_i32_1 = arith.constant 0 : i32
    return %c0_i32, %c0_i32_0 : i32, i32
  }
  func.func @transform_2(%arg0: i32) -> (i32, i32) {
    %c0_i32 = arith.constant 0 : i32
    %c0_i32_0 = arith.constant 0 : i32
    %c0_i32_1 = arith.constant 0 : i32
    return %c0_i32, %c0_i32_0 : i32, i32
  }
  func.func @transform_3(%arg0: i32) -> (i32, i32) {
    %c0_i32 = arith.constant 0 : i32
    %c0_i32_0 = arith.constant 0 : i32
    %c0_i32_1 = arith.constant 0 : i32
    return %c0_i32, %c0_i32_0 : i32, i32
  }
  func.func @transform_4(%arg0: i32) -> (i32, i32) {
    %c0_i32 = arith.constant 0 : i32
    %c0_i32_0 = arith.constant 0 : i32
    %c0_i32_1 = arith.constant 0 : i32
    return %c0_i32, %c0_i32_0 : i32, i32
  }
  func.func @transform_5(%arg0: i32) -> (i32, i32) {
    %c0_i32 = arith.constant 0 : i32
    %c0_i32_0 = arith.constant 0 : i32
    %c0_i32_1 = arith.constant 0 : i32
    return %c0_i32, %c0_i32_0 : i32, i32
  }
  func.func @transform_6(%arg0: i32) -> (i32, i32) {
    %c0_i32 = arith.constant 0 : i32
    %c0_i32_0 = arith.constant 0 : i32
    %c0_i32_1 = arith.constant 0 : i32
    return %c0_i32, %c0_i32_0 : i32, i32
  }
  func.func @transform_7(%arg0: i32) -> (i32, i32) {
    %c0_i32 = arith.constant 0 : i32
    %c0_i32_0 = arith.constant 0 : i32
    %c0_i32_1 = arith.constant 0 : i32
    return %c0_i32, %c0_i32_0 : i32, i32
  }
}

</mosaic_0001>

<llo_original>
// kernel: tpu_custom_call.1
$region0: #{tpu_custom_call.1}
  #allocation0 [shape = 'u32[]', space=smem, size = 0x4, offset = 0x4, fixed_abs, tag = 'smem constant byte address 0x4 - core index']
  #allocation1 [shape = 'u32[144,128]{1,0:T(1,128)}', space=vmem, size = 0x12000, scoped, tag = 'internal scratch']
  %s0 = inlined_call_operand.hbm [shape: f32[16,32], index: 0, kind: input, shape index: {}]
  %s1 = inlined_call_operand.vmem [shape: f32[1,32], index: 1, kind: input, shape index: {}]
  %s2 = inlined_call_operand.vmem [shape: f32[1,32], index: 2, kind: input, shape index: {}]
  %s3 = inlined_call_operand.hbm [shape: bf16[32,96], index: 3, kind: input, shape index: {}]
  %s4 = inlined_call_operand.vmem [shape: f32[1,96], index: 4, kind: input, shape index: {}]
  %s5 = inlined_call_operand.hbm [shape: bf16[32,32], index: 5, kind: input, shape index: {}]
  %s6 = inlined_call_operand.vmem [shape: f32[1,32], index: 6, kind: input, shape index: {}]
  %s7 = inlined_call_operand.hbm [shape: f32[16,32], index: 7, kind: output, shape index: {}]
  %s8 = sld [smem:[#allocation0]]
  $region50: #{tpu_custom_call.1} parent=0
    _
  %s10 = ssub.s32 1, %s8
  %s11 = scalar_select 0, %s10, %s8
  $region1: #{tpu_custom_call.1} parent=0
    #allocation2 [shape = 'u8[8192]{0}', space=vmem, size = 0x2000, scoped, tag = 'input window, operand 0, single buffered']
    #allocation3 [shape = 's32[1]{0}', space=sflag, size = 0x4, scoped, tag = 'scoped memory for tpu_custom_call.1']
    #allocation4 [shape = 's32[1]{0}', space=sflag, size = 0x4, scoped, tag = 'scoped memory for tpu_custom_call.1']
    #allocation5 [shape = 'u8[8192]{0}', space=vmem, size = 0x2000, scoped, tag = 'input window, operand 3, single buffered']
    #allocation6 [shape = 's32[1]{0}', space=sflag, size = 0x4, scoped, tag = 'scoped memory for tpu_custom_call.1']
    #allocation7 [shape = 'u8[8192]{0}', space=vmem, size = 0x2000, scoped, tag = 'input window, operand 5, single buffered']
    #allocation8 [shape = 'u8[8192]{0}', space=vmem, size = 0x2000, scoped, tag = 'output window, operand 0, single buffered']
    %12 = vsyncpa [#allocation3], 0
    %13 = vsyncpa [#allocation6], 0
    %14 = vsyncpa [#allocation4], 0
    // Predicated region
    $region2: #{tpu_custom_call.1} parent=1 // pred_check
      _
    $region3: #{tpu_custom_call.1} parent=1 // pred_check_branch
      %16 = sbr.rel (0) target = $region5
    $region4: #{tpu_custom_call.1} parent=1 // pred_region
      %s18 = ssub.s32 256, 256
      %19 = vsyncadd [#allocation3], %s18
      %s20 = sshll.u32 [#allocation2], 4
      %s21 = int_to_ptr.vmem [resolvable:$true] %s20
      %26 = dma.hbm_to_vmem [thread:$0]  %s0, 256, %s21, [#allocation3], 128, 128, 8
    $region5: #{tpu_custom_call.1} parent=1 // pred_fallthru
      _
    // Predicated region
    $region6: #{tpu_custom_call.1} parent=1 // pred_check
      _
    $region7: #{tpu_custom_call.1} parent=1 // pred_check_branch
      %28 = sbr.rel (0) target = $region9
    $region8: #{tpu_custom_call.1} parent=1 // pred_region
      _
    $region9: #{tpu_custom_call.1} parent=1 // pred_fallthru
      _
    // Predicated region
    $region10: #{tpu_custom_call.1} parent=1 // pred_check
      _
    $region11: #{tpu_custom_call.1} parent=1 // pred_check_branch
      %30 = sbr.rel (0) target = $region13
    $region12: #{tpu_custom_call.1} parent=1 // pred_region
      _
    $region13: #{tpu_custom_call.1} parent=1 // pred_fallthru
      _
    // Predicated region
    $region14: #{tpu_custom_call.1} parent=1 // pred_check
      _
    $region15: #{tpu_custom_call.1} parent=1 // pred_check_branch
      %32 = sbr.rel (0) target = $region17
    $region16: #{tpu_custom_call.1} parent=1 // pred_region
      %s34 = ssub.s32 256, 256
      %35 = vsyncadd [#allocation6], %s34
      %s36 = sshll.u32 [#allocation5], 4
      %s37 = int_to_ptr.vmem [resolvable:$true] %s36
      %42 = dma.hbm_to_vmem [thread:$0]  %s3, 256, %s37, [#allocation6], 64, 64, 4
    $region17: #{tpu_custom_call.1} parent=1 // pred_fallthru
      _
    // Predicated region
    $region18: #{tpu_custom_call.1} parent=1 // pred_check
      _
    $region19: #{tpu_custom_call.1} parent=1 // pred_check_branch
      %44 = sbr.rel (0) target = $region21
    $region20: #{tpu_custom_call.1} parent=1 // pred_region
      _
    $region21: #{tpu_custom_call.1} parent=1 // pred_fallthru
      _
    // Predicated region
    $region22: #{tpu_custom_call.1} parent=1 // pred_check
      _
    $region23: #{tpu_custom_call.1} parent=1 // pred_check_branch
      %46 = sbr.rel (0) target = $region25
    $region24: #{tpu_custom_call.1} parent=1 // pred_region
      %s48 = ssub.s32 256, 256
      %49 = vsyncadd [#allocation6], %s48
      %s50 = sshll.u32 [#allocation7], 4
      %s51 = int_to_ptr.vmem [resolvable:$true] %s50
      %56 = dma.hbm_to_vmem [thread:$0]  %s5, 256, %s51, [#allocation6], 64, 64, 4
    $region25: #{tpu_custom_call.1} parent=1 // pred_fallthru
      _
    // Predicated region
    $region26: #{tpu_custom_call.1} parent=1 // pred_check
      _
    $region27: #{tpu_custom_call.1} parent=1 // pred_check_branch
      %58 = sbr.rel (0) target = $region29
    $region28: #{tpu_custom_call.1} parent=1 // pred_region
      _
    $region29: #{tpu_custom_call.1} parent=1 // pred_fallthru
      _
    // Predicated region
    $region30: #{tpu_custom_call.1} parent=1 // pred_check
      _
    $region31: #{tpu_custom_call.1} parent=1 // pred_check_branch
      %60 = sbr.rel (0) target = $region33
    $region32: #{tpu_custom_call.1} parent=1 // pred_region
      %61 = dma.done [#allocation3], 256
    $region33: #{tpu_custom_call.1} parent=1 // pred_fallthru
      _
    // Predicated region
    $region34: #{tpu_custom_call.1} parent=1 // pred_check
      _
    $region35: #{tpu_custom_call.1} parent=1 // pred_check_branch
      %63 = sbr.rel (0) target = $region37
    $region36: #{tpu_custom_call.1} parent=1 // pred_region
      %64 = dma.done [#allocation6], 256
    $region37: #{tpu_custom_call.1} parent=1 // pred_fallthru
      _
    // Predicated region
    $region38: #{tpu_custom_call.1} parent=1 // pred_check
      _
    $region39: #{tpu_custom_call.1} parent=1 // pred_check_branch
      %66 = sbr.rel (0) target = $region41
    $region40: #{tpu_custom_call.1} parent=1 // pred_region
      %67 = dma.done [#allocation6], 256
    $region41: #{tpu_custom_call.1} parent=1 // pred_fallthru
      _
    %v69 = vld [vmem:[#allocation2] sm:$0xff]
    %v70 = vld [vmem:[#allocation2 + $0x8] sm:$0xff]
    %vm71 = vcmask 261120
    %v72 = vsel %vm71, %v69, 0.0
    %73 = vadd.xlane.f32.xlu0 %v72
    %v74 = vpop.xlane.xlu0 %73
    %v75 = vsel %vm71, %v70, 0.0
    %76 = vadd.xlane.f32.xlu0 %v75
    %v77 = vpop.xlane.xlu0 %76
    %v78 = vrcp.pop 32.0
    %v79 = vmul.f32 %v74, %v78
    %v80 = vmul.f32 %v77, %v78
    %v81 = vsub.f32 %v69, %v79
    %v82 = vsub.f32 %v70, %v80
    %v83 = vmul.f32 %v81, %v81
    %v84 = vmul.f32 %v82, %v82
    %v85 = vsel %vm71, %v83, 0.0
    %86 = vadd.xlane.f32.xlu0 %v85
    %v87 = vpop.xlane.xlu0 %86
    %v88 = vsel %vm71, %v84, 0.0
    %89 = vadd.xlane.f32.xlu0 %v88
    %v90 = vpop.xlane.xlu0 %89
    %v91 = vmul.f32 %v87, %v78
    %v92 = vmul.f32 %v90, %v78
    %v93 = vadd.f32 %v91, 1e-05
    %v94 = vadd.f32 %v92, 1e-05
    %v95 = vrsqrt.pop %v93
    %v96 = vrsqrt.pop %v94
    %v97 = vmul.f32 %v81, %v95
    %v98 = vmul.f32 %v82, %v96
    %v99 = vld [vmem:[%s1] sm:$0x1]
    %v101 = vlaneseq
    %v102 = vshrl.u32 %v101, 7
    %v103 = vsub.s32 0, %v102
    %v104 = vrot.slane %v99, %v103
    %v106 = vmul.f32 %v97, %v104
    %v107 = vmul.f32 %v98, %v104
    %v108 = vld [vmem:[%s2] sm:$0x1]
    %v110 = vlaneseq
    %v111 = vshrl.u32 %v110, 7
    %v112 = vsub.s32 0, %v111
    %v113 = vrot.slane %v108, %v112
    %v115 = vadd.f32 %v106, %v113
    %v116 = vadd.f32 %v107, %v113
    %v117 = vpack.c.bf16 %v116, %v115
    %v118 = vld [vmem:[#allocation5] sm:$0xf]
    %v119 = vld [vmem:[#allocation5 + $0x4] sm:$0xf]
    %v120 = vld [vmem:[#allocation5 + $0x8] sm:$0xf]
    %v121 = vld [vmem:[#allocation5 + $0xc] sm:$0xf]
    %v122 = vld [vmem:[%s4] sm:$0x1]
    %v124 = vlaneseq
    %v125 = vshrl.u32 %v124, 7
    %v126 = vsub.s32 0, %v125
    %v127 = vrot.slane %v122, %v126
    %v133 = vunpack.c.l.b16 %v118
    %v134 = vunpack.c.l.b16 %v119
    %v135 = vunpack.c.l.b16 %v120
    %v136 = vunpack.c.l.b16 %v121
    %v137 = vpack.c.b16 %v134, %v133
    %v138 = vpack.c.b16 %v136, %v135
    %v142 = vsel %vm71, %v117, 0
    %144 = vmatprep.subr.bf16.mxu0 0
    %145 = vmatpush1.bf16.msra.mxu0 0
    %146 = vmatprep.subr.bf16.mxu0 0
    %147 = vmatpush1.bf16.msra.mxu0 0
    %148 = vmatprep.subr.bf16.mxu0 0
    %149 = vmatpush1.bf16.msra.mxu0 0
    %150 = vmatprep.subr.bf16.mxu0 0
    %151 = vmatpush1.bf16.msra.mxu0 0
    %152 = vmatprep.subr.bf16.mxu0 0
    %153 = vmatpush1.bf16.msra.mxu0 0
    %154 = vmatprep.subr.bf16.mxu0 0
    %155 = vmatpush1.bf16.msra.mxu0 0
    %156 = vmatprep.subr.bf16.mxu0 0
    %157 = vmatpush1.bf16.msra.mxu0 %v138
    %158 = vmatprep.subr.bf16.mxu0 0
    %159 = vmatpush1.bf16.msra.mxu0 %v137
    %160 = vmatprep.subr.bf16.mxu0 0
    %161 = vmatpush2.bf16.msra.mxu0 0
    %162 = vmatprep.subr.bf16.mxu0 0
    %163 = vmatpush2.bf16.msra.mxu0 0
    %164 = vmatprep.subr.bf16.mxu0 0
    %165 = vmatpush2.bf16.msra.mxu0 0
    %166 = vmatprep.subr.bf16.mxu0 0
    %167 = vmatpush2.bf16.msra.mxu0 0
    %168 = vmatprep.subr.bf16.mxu0 0
    %169 = vmatpush2.bf16.msra.mxu0 0
    %170 = vmatprep.subr.bf16.mxu0 0
    %171 = vmatpush2.bf16.msra.mxu0 0
    %172 = vmatprep.subr.bf16.mxu0 0
    %173 = vmatpush2.bf16.msra.mxu0 0
    %174 = vmatprep.subr.bf16.mxu0 0
    %175 = vmatpush2.bf16.msra.mxu0 0
    %176 = vmatprep.mubr.bf16.mxu0 0
    %177 = vmatmul.mubr.bf16.gmra.mxu0 %v142
    %v178 = vpop.f32.mrf.mxu0
    %v179 = vadd.f32 %v127, %v178
    %v180 = vpop.f32.mrf.mxu0
    %v181 = vpop.f32.mrf.mxu0
    %v182 = vadd.f32 %v127, %v181
    %v183 = vpop.f32.mrf.mxu0
    %184 = vdwg.mxu0
    %v185 = vmul.f32 %v179, 0.35355338
    %v186 = vmul.f32 %v182, 0.35355338
    %v187 = vpack.c.bf16 %v185, %v185
    %v188 = vpack.c.bf16 %v186, %v186
    %v189 = vpack.c.bf16 %v179, %v179
    %v190 = vpack.c.bf16 %v182, %v182
    %v191 = vld [vmem:[#allocation7] sm:$0xf]
    %v192 = vld [vmem:[#allocation7 + $0x4] sm:$0xf]
    %v193 = vld [vmem:[#allocation7 + $0x8] sm:$0xf]
    %v194 = vld [vmem:[#allocation7 + $0xc] sm:$0xf]
    %196 = vrot.lane.b32.xlu0 %v189, 96
    %v197 = vpop.permute.xlu0 %196
    %vm198 = vcmask 64512
    %v200 = vsel %vm198, %v187, 0
    %v203 = vsel %vm198, %v197, 0
    %205 = vmatprep.subr.bf16.mxu0 0
    %206 = vmatpush1.bf16.xpose.msra.mxu0 0
    %207 = vmatprep.subr.bf16.mxu0 0
    %208 = vmatpush1.bf16.xpose.msra.mxu0 0
    %209 = vmatprep.subr.bf16.mxu0 0
    %210 = vmatpush1.bf16.xpose.msra.mxu0 0
    %211 = vmatprep.subr.bf16.mxu0 0
    %212 = vmatpush1.bf16.xpose.msra.mxu0 0
    %213 = vmatprep.subr.bf16.mxu0 0
    %214 = vmatpush1.bf16.xpose.msra.mxu0 0
    %215 = vmatprep.subr.bf16.mxu0 0
    %216 = vmatpush1.bf16.xpose.msra.mxu0 0
    %217 = vmatprep.subr.bf16.mxu0 0
    %218 = vmatpush1.bf16.xpose.msra.mxu0 0
    %219 = vmatprep.subr.bf16.mxu0 0
    %220 = vmatpush1.bf16.xpose.msra.mxu0 %v203
    %221 = vmatprep.subr.bf16.mxu0 0
    %222 = vmatpush2.bf16.xpose.msra.mxu0 0
    %223 = vmatprep.subr.bf16.mxu0 0
    %224 = vmatpush2.bf16.xpose.msra.mxu0 0
    %225 = vmatprep.subr.bf16.mxu0 0
    %226 = vmatpush2.bf16.xpose.msra.mxu0 0
    %227 = vmatprep.subr.bf16.mxu0 0
    %228 = vmatpush2.bf16.xpose.msra.mxu0 0
    %229 = vmatprep.subr.bf16.mxu0 0
    %230 = vmatpush2.bf16.xpose.msra.mxu0 0
    %231 = vmatprep.subr.bf16.mxu0 0
    %232 = vmatpush2.bf16.xpose.msra.mxu0 0
    %233 = vmatprep.subr.bf16.mxu0 0
    %234 = vmatpush2.bf16.xpose.msra.mxu0 0
    %235 = vmatprep.subr.bf16.mxu0 0
    %236 = vmatpush2.bf16.xpose.msra.mxu0 0
    %237 = vmatprep.mubr.bf16.mxu0 0
    %238 = vmatmul.mubr.bf16.gmra.mxu0 %v200
    %v239 = vpop.f32.mrf.mxu0
    %v240 = vadd.f32 0.0, %v239
    %v241 = vpop.f32.mrf.mxu0
    %v242 = vpop.f32.mrf.mxu0
    %v243 = vpop.f32.mrf.mxu0
    %244 = vdwg.mxu0
    %246 = vrot.lane.b32.xlu0 %v190, 96
    %v247 = vpop.permute.xlu0 %246
    %v249 = vsel %vm198, %v188, 0
    %v252 = vsel %vm198, %v247, 0
    %254 = vmatprep.subr.bf16.mxu0 0
    %255 = vmatpush1.bf16.xpose.msra.mxu0 0
    %256 = vmatprep.subr.bf16.mxu0 0
    %257 = vmatpush1.bf16.xpose.msra.mxu0 0
    %258 = vmatprep.subr.bf16.mxu0 0
    %259 = vmatpush1.bf16.xpose.msra.mxu0 0
    %260 = vmatprep.subr.bf16.mxu0 0
    %261 = vmatpush1.bf16.xpose.msra.mxu0 0
    %262 = vmatprep.subr.bf16.mxu0 0
    %263 = vmatpush1.bf16.xpose.msra.mxu0 0
    %264 = vmatprep.subr.bf16.mxu0 0
    %265 = vmatpush1.bf16.xpose.msra.mxu0 0
    %266 = vmatprep.subr.bf16.mxu0 0
    %267 = vmatpush1.bf16.xpose.msra.mxu0 0
    %268 = vmatprep.subr.bf16.mxu0 0
    %269 = vmatpush1.bf16.xpose.msra.mxu0 %v252
    %270 = vmatprep.subr.bf16.mxu0 0
    %271 = vmatpush2.bf16.xpose.msra.mxu0 0
    %272 = vmatprep.subr.bf16.mxu0 0
    %273 = vmatpush2.bf16.xpose.msra.mxu0 0
    %274 = vmatprep.subr.bf16.mxu0 0
    %275 = vmatpush2.bf16.xpose.msra.mxu0 0
    %276 = vmatprep.subr.bf16.mxu0 0
    %277 = vmatpush2.bf16.xpose.msra.mxu0 0
    %278 = vmatprep.subr.bf16.mxu0 0
    %279 = vmatpush2.bf16.xpose.msra.mxu0 0
    %280 = vmatprep.subr.bf16.mxu0 0
    %281 = vmatpush2.bf16.xpose.msra.mxu0 0
    %282 = vmatprep.subr.bf16.mxu0 0
    %283 = vmatpush2.bf16.xpose.msra.mxu0 0
    %284 = vmatprep.subr.bf16.mxu0 0
    %285 = vmatpush2.bf16.xpose.msra.mxu0 0
    %286 = vmatprep.mubr.bf16.mxu0 0
    %287 = vmatmul.mubr.bf16.gmra.mxu0 %v249
    %v288 = vpop.f32.mrf.mxu0
    %v289 = vadd.f32 0.0, %v288
    %v290 = vpop.f32.mrf.mxu0
    %v291 = vpop.f32.mrf.mxu0
    %v292 = vpop.f32.mrf.mxu0
    %293 = vdwg.mxu0
    %v294 = vsel %vm198, %v240, -inf
    %295 = vmax.xlane.f32.xlu0 %v294
    %v296 = vpop.xlane.xlu0 %295
    %v297 = vsel %vm198, %v289, -inf
    %298 = vmax.xlane.f32.xlu0 %v297
    %v299 = vpop.xlane.xlu0 %298
    %v300 = vsub.f32 %v240, %v296
    %v301 = vsub.f32 %v289, %v299
    %v302 = vmul.f32 %v300, 1.442695
    %v303 = vpow.pop %v302
    %v304 = vmul.f32 %v301, 1.442695
    %v305 = vpow.pop %v304
    %v306 = vsel %vm198, %v303, 0.0
    %307 = vadd.xlane.f32.xlu0 %v306
    %v308 = vpop.xlane.xlu0 %307
    %v309 = vsel %vm198, %v305, 0.0
    %310 = vadd.xlane.f32.xlu0 %v309
    %v311 = vpop.xlane.xlu0 %310
    %v312 = vrcp.pop %v308
    %v313 = vrcp.pop %v311
    %v314 = vmul.f32 %v303, %v312
    %v315 = vmul.f32 %v305, %v313
    %v316 = vpack.c.bf16 %v314, %v314
    %v317 = vpack.c.bf16 %v315, %v315
    %318 = vrot.lane.b32.xlu0 %v189, 64
    %v319 = vpop.permute.xlu0 %318
    %v321 = vsel %vm198, %v316, 0
    %vm323 = vcmask 1043456
    %v325 = vsel %vm323, %v319, 0
    %327 = vmatprep.subr.bf16.mxu0 0
    %328 = vmatpush1.bf16.msra.mxu0 0
    %329 = vmatprep.subr.bf16.mxu0 0
    %330 = vmatpush1.bf16.msra.mxu0 0
    %331 = vmatprep.subr.bf16.mxu0 0
    %332 = vmatpush1.bf16.msra.mxu0 0
    %333 = vmatprep.subr.bf16.mxu0 0
    %334 = vmatpush1.bf16.msra.mxu0 0
    %335 = vmatprep.subr.bf16.mxu0 0
    %336 = vmatpush1.bf16.msra.mxu0 0
    %337 = vmatprep.subr.bf16.mxu0 0
    %338 = vmatpush1.bf16.msra.mxu0 0
    %339 = vmatprep.subr.bf16.mxu0 0
    %340 = vmatpush1.bf16.msra.mxu0 0
    %341 = vmatprep.subr.bf16.mxu0 0
    %342 = vmatpush1.bf16.msra.mxu0 %v325
    %343 = vmatprep.subr.bf16.mxu0 0
    %344 = vmatpush2.bf16.msra.mxu0 0
    %345 = vmatprep.subr.bf16.mxu0 0
    %346 = vmatpush2.bf16.msra.mxu0 0
    %347 = vmatprep.subr.bf16.mxu0 0
    %348 = vmatpush2.bf16.msra.mxu0 0
    %349 = vmatprep.subr.bf16.mxu0 0
    %350 = vmatpush2.bf16.msra.mxu0 0
    %351 = vmatprep.subr.bf16.mxu0 0
    %352 = vmatpush2.bf16.msra.mxu0 0
    %353 = vmatprep.subr.bf16.mxu0 0
    %354 = vmatpush2.bf16.msra.mxu0 0
    %355 = vmatprep.subr.bf16.mxu0 0
    %356 = vmatpush2.bf16.msra.mxu0 0
    %357 = vmatprep.subr.bf16.mxu0 0
    %358 = vmatpush2.bf16.msra.mxu0 0
    %359 = vmatprep.mubr.bf16.mxu0 0
    %360 = vmatmul.mubr.bf16.gmra.mxu0 %v321
    %v361 = vpop.f32.mrf.mxu0
    %v362 = vadd.f32 0.0, %v361
    %v363 = vpop.f32.mrf.mxu0
    %v364 = vpop.f32.mrf.mxu0
    %v365 = vpop.f32.mrf.mxu0
    %366 = vdwg.mxu0
    %367 = vrot.lane.b32.xlu0 %v190, 64
    %v368 = vpop.permute.xlu0 %367
    %v370 = vsel %vm198, %v317, 0
    %v373 = vsel %vm323, %v368, 0
    %375 = vmatprep.subr.bf16.mxu0 0
    %376 = vmatpush1.bf16.msra.mxu0 0
    %377 = vmatprep.subr.bf16.mxu0 0
    %378 = vmatpush1.bf16.msra.mxu0 0
    %379 = vmatprep.subr.bf16.mxu0 0
    %380 = vmatpush1.bf16.msra.mxu0 0
    %381 = vmatprep.subr.bf16.mxu0 0
    %382 = vmatpush1.bf16.msra.mxu0 0
    %383 = vmatprep.subr.bf16.mxu0 0
    %384 = vmatpush1.bf16.msra.mxu0 0
    %385 = vmatprep.subr.bf16.mxu0 0
    %386 = vmatpush1.bf16.msra.mxu0 0
    %387 = vmatprep.subr.bf16.mxu0 0
    %388 = vmatpush1.bf16.msra.mxu0 0
    %389 = vmatprep.subr.bf16.mxu0 0
    %390 = vmatpush1.bf16.msra.mxu0 %v373
    %391 = vmatprep.subr.bf16.mxu0 0
    %392 = vmatpush2.bf16.msra.mxu0 0
    %393 = vmatprep.subr.bf16.mxu0 0
    %394 = vmatpush2.bf16.msra.mxu0 0
    %395 = vmatprep.subr.bf16.mxu0 0
    %396 = vmatpush2.bf16.msra.mxu0 0
    %397 = vmatprep.subr.bf16.mxu0 0
    %398 = vmatpush2.bf16.msra.mxu0 0
    %399 = vmatprep.subr.bf16.mxu0 0
    %400 = vmatpush2.bf16.msra.mxu0 0
    %401 = vmatprep.subr.bf16.mxu0 0
    %402 = vmatpush2.bf16.msra.mxu0 0
    %403 = vmatprep.subr.bf16.mxu0 0
    %404 = vmatpush2.bf16.msra.mxu0 0
    %405 = vmatprep.subr.bf16.mxu0 0
    %406 = vmatpush2.bf16.msra.mxu0 0
    %407 = vmatprep.mubr.bf16.mxu0 0
    %408 = vmatmul.mubr.bf16.gmra.mxu0 %v370
    %v409 = vpop.f32.mrf.mxu0
    %v410 = vadd.f32 0.0, %v409
    %v411 = vpop.f32.mrf.mxu0
    %v412 = vpop.f32.mrf.mxu0
    %v413 = vpop.f32.mrf.mxu0
    %414 = vdwg.mxu0
    %v415 = vpack.c.bf16 %v410, %v362
    %417 = vrot.lane.b32.xlu0 %v187, 120
    %v418 = vpop.permute.xlu0 %417
    %419 = vrot.lane.b32.xlu0 %v189, 88
    %v420 = vpop.permute.xlu0 %419
    %v422 = vsel %vm198, %v418, 0
    %v425 = vsel %vm198, %v420, 0
    %427 = vmatprep.subr.bf16.mxu0 0
    %428 = vmatpush1.bf16.xpose.msra.mxu0 0
    %429 = vmatprep.subr.bf16.mxu0 0
    %430 = vmatpush1.bf16.xpose.msra.mxu0 0
    %431 = vmatprep.subr.bf16.mxu0 0
    %432 = vmatpush1.bf16.xpose.msra.mxu0 0
    %433 = vmatprep.subr.bf16.mxu0 0
    %434 = vmatpush1.bf16.xpose.msra.mxu0 0
    %435 = vmatprep.subr.bf16.mxu0 0
    %436 = vmatpush1.bf16.xpose.msra.mxu0 0
    %437 = vmatprep.subr.bf16.mxu0 0
    %438 = vmatpush1.bf16.xpose.msra.mxu0 0
    %439 = vmatprep.subr.bf16.mxu0 0
    %440 = vmatpush1.bf16.xpose.msra.mxu0 0
    %441 = vmatprep.subr.bf16.mxu0 0
    %442 = vmatpush1.bf16.xpose.msra.mxu0 %v425
    %443 = vmatprep.subr.bf16.mxu0 0
    %444 = vmatpush2.bf16.xpose.msra.mxu0 0
    %445 = vmatprep.subr.bf16.mxu0 0
    %446 = vmatpush2.bf16.xpose.msra.mxu0 0
    %447 = vmatprep.subr.bf16.mxu0 0
    %448 = vmatpush2.bf16.xpose.msra.mxu0 0
    %449 = vmatprep.subr.bf16.mxu0 0
    %450 = vmatpush2.bf16.xpose.msra.mxu0 0
    %451 = vmatprep.subr.bf16.mxu0 0
    %452 = vmatpush2.bf16.xpose.msra.mxu0 0
    %453 = vmatprep.subr.bf16.mxu0 0
    %454 = vmatpush2.bf16.xpose.msra.mxu0 0
    %455 = vmatprep.subr.bf16.mxu0 0
    %456 = vmatpush2.bf16.xpose.msra.mxu0 0
    %457 = vmatprep.subr.bf16.mxu0 0
    %458 = vmatpush2.bf16.xpose.msra.mxu0 0
    %459 = vmatprep.mubr.bf16.mxu0 0
    %460 = vmatmul.mubr.bf16.gmra.mxu0 %v422
    %v461 = vpop.f32.mrf.mxu0
    %v462 = vadd.f32 0.0, %v461
    %v463 = vpop.f32.mrf.mxu0
    %v464 = vpop.f32.mrf.mxu0
    %v465 = vpop.f32.mrf.mxu0
    %466 = vdwg.mxu0
    %468 = vrot.lane.b32.xlu0 %v188, 120
    %v469 = vpop.permute.xlu0 %468
    %470 = vrot.lane.b32.xlu0 %v190, 88
    %v471 = vpop.permute.xlu0 %470
    %v473 = vsel %vm198, %v469, 0
    %v476 = vsel %vm198, %v471, 0
    %478 = vmatprep.subr.bf16.mxu0 0
    %479 = vmatpush1.bf16.xpose.msra.mxu0 0
    %480 = vmatprep.subr.bf16.mxu0 0
    %481 = vmatpush1.bf16.xpose.msra.mxu0 0
    %482 = vmatprep.subr.bf16.mxu0 0
    %483 = vmatpush1.bf16.xpose.msra.mxu0 0
    %484 = vmatprep.subr.bf16.mxu0 0
    %485 = vmatpush1.bf16.xpose.msra.mxu0 0
    %486 = vmatprep.subr.bf16.mxu0 0
    %487 = vmatpush1.bf16.xpose.msra.mxu0 0
    %488 = vmatprep.subr.bf16.mxu0 0
    %489 = vmatpush1.bf16.xpose.msra.mxu0 0
    %490 = vmatprep.subr.bf16.mxu0 0
    %491 = vmatpush1.bf16.xpose.msra.mxu0 0
    %492 = vmatprep.subr.bf16.mxu0 0
    %493 = vmatpush1.bf16.xpose.msra.mxu0 %v476
    %494 = vmatprep.subr.bf16.mxu0 0
    %495 = vmatpush2.bf16.xpose.msra.mxu0 0
    %496 = vmatprep.subr.bf16.mxu0 0
    %497 = vmatpush2.bf16.xpose.msra.mxu0 0
    %498 = vmatprep.subr.bf16.mxu0 0
    %499 = vmatpush2.bf16.xpose.msra.mxu0 0
    %500 = vmatprep.subr.bf16.mxu0 0
    %501 = vmatpush2.bf16.xpose.msra.mxu0 0
    %502 = vmatprep.subr.bf16.mxu0 0
    %503 = vmatpush2.bf16.xpose.msra.mxu0 0
    %504 = vmatprep.subr.bf16.mxu0 0
    %505 = vmatpush2.bf16.xpose.msra.mxu0 0
    %506 = vmatprep.subr.bf16.mxu0 0
    %507 = vmatpush2.bf16.xpose.msra.mxu0 0
    %508 = vmatprep.subr.bf16.mxu0 0
    %509 = vmatpush2.bf16.xpose.msra.mxu0 0
    %510 = vmatprep.mubr.bf16.mxu0 0
    %511 = vmatmul.mubr.bf16.gmra.mxu0 %v473
    %v512 = vpop.f32.mrf.mxu0
    %v513 = vadd.f32 0.0, %v512
    %v514 = vpop.f32.mrf.mxu0
    %v515 = vpop.f32.mrf.mxu0
    %v516 = vpop.f32.mrf.mxu0
    %517 = vdwg.mxu0
    %v518 = vsel %vm198, %v462, -inf
    %519 = vmax.xlane.f32.xlu0 %v518
    %v520 = vpop.xlane.xlu0 %519
    %v521 = vsel %vm198, %v513, -inf
    %522 = vmax.xlane.f32.xlu0 %v521
    %v523 = vpop.xlane.xlu0 %522
    %v524 = vsub.f32 %v462, %v520
    %v525 = vsub.f32 %v513, %v523
    %v526 = vmul.f32 %v524, 1.442695
    %v527 = vpow.pop %v526
    %v528 = vmul.f32 %v525, 1.442695
    %v529 = vpow.pop %v528
    %v530 = vsel %vm198, %v527, 0.0
    %531 = vadd.xlane.f32.xlu0 %v530
    %v532 = vpop.xlane.xlu0 %531
    %v533 = vsel %vm198, %v529, 0.0
    %534 = vadd.xlane.f32.xlu0 %v533
    %v535 = vpop.xlane.xlu0 %534
    %v536 = vrcp.pop %v532
    %v537 = vrcp.pop %v535
    %v538 = vmul.f32 %v527, %v536
    %v539 = vmul.f32 %v529, %v537
    %v540 = vpack.c.bf16 %v538, %v538
    %v541 = vpack.c.bf16 %v539, %v539
    %542 = vrot.lane.b32.xlu0 %v189, 56
    %v543 = vpop.permute.xlu0 %542
    %v545 = vsel %vm198, %v540, 0
    %v548 = vsel %vm323, %v543, 0
    %550 = vmatprep.subr.bf16.mxu0 0
    %551 = vmatpush1.bf16.msra.mxu0 0
    %552 = vmatprep.subr.bf16.mxu0 0
    %553 = vmatpush1.bf16.msra.mxu0 0
    %554 = vmatprep.subr.bf16.mxu0 0
    %555 = vmatpush1.bf16.msra.mxu0 0
    %556 = vmatprep.subr.bf16.mxu0 0
    %557 = vmatpush1.bf16.msra.mxu0 0
    %558 = vmatprep.subr.bf16.mxu0 0
    %559 = vmatpush1.bf16.msra.mxu0 0
    %560 = vmatprep.subr.bf16.mxu0 0
    %561 = vmatpush1.bf16.msra.mxu0 0
    %562 = vmatprep.subr.bf16.mxu0 0
    %563 = vmatpush1.bf16.msra.mxu0 0
    %564 = vmatprep.subr.bf16.mxu0 0
    %565 = vmatpush1.bf16.msra.mxu0 %v548
    %566 = vmatprep.subr.bf16.mxu0 0
    %567 = vmatpush2.bf16.msra.mxu0 0
    %568 = vmatprep.subr.bf16.mxu0 0
    %569 = vmatpush2.bf16.msra.mxu0 0
    %570 = vmatprep.subr.bf16.mxu0 0
    %571 = vmatpush2.bf16.msra.mxu0 0
    %572 = vmatprep.subr.bf16.mxu0 0
    %573 = vmatpush2.bf16.msra.mxu0 0
    %574 = vmatprep.subr.bf16.mxu0 0
    %575 = vmatpush2.bf16.msra.mxu0 0
    %576 = vmatprep.subr.bf16.mxu0 0
    %577 = vmatpush2.bf16.msra.mxu0 0
    %578 = vmatprep.subr.bf16.mxu0 0
    %579 = vmatpush2.bf16.msra.mxu0 0
    %580 = vmatprep.subr.bf16.mxu0 0
    %581 = vmatpush2.bf16.msra.mxu0 0
    %582 = vmatprep.mubr.bf16.mxu0 0
    %583 = vmatmul.mubr.bf16.gmra.mxu0 %v545
    %v584 = vpop.f32.mrf.mxu0
    %v585 = vadd.f32 0.0, %v584
    %v586 = vpop.f32.mrf.mxu0
    %v587 = vpop.f32.mrf.mxu0
    %v588 = vpop.f32.mrf.mxu0
    %589 = vdwg.mxu0
    %590 = vrot.lane.b32.xlu0 %v190, 56
    %v591 = vpop.permute.xlu0 %590
    %v593 = vsel %vm198, %v541, 0
    %v596 = vsel %vm323, %v591, 0
    %598 = vmatprep.subr.bf16.mxu0 0
    %599 = vmatpush1.bf16.msra.mxu0 0
    %600 = vmatprep.subr.bf16.mxu0 0
    %601 = vmatpush1.bf16.msra.mxu0 0
    %602 = vmatprep.subr.bf16.mxu0 0
    %603 = vmatpush1.bf16.msra.mxu0 0
    %604 = vmatprep.subr.bf16.mxu0 0
    %605 = vmatpush1.bf16.msra.mxu0 0
    %606 = vmatprep.subr.bf16.mxu0 0
    %607 = vmatpush1.bf16.msra.mxu0 0
    %608 = vmatprep.subr.bf16.mxu0 0
    %609 = vmatpush1.bf16.msra.mxu0 0
    %610 = vmatprep.subr.bf16.mxu0 0
    %611 = vmatpush1.bf16.msra.mxu0 0
    %612 = vmatprep.subr.bf16.mxu0 0
    %613 = vmatpush1.bf16.msra.mxu0 %v596
    %614 = vmatprep.subr.bf16.mxu0 0
    %615 = vmatpush2.bf16.msra.mxu0 0
    %616 = vmatprep.subr.bf16.mxu0 0
    %617 = vmatpush2.bf16.msra.mxu0 0
    %618 = vmatprep.subr.bf16.mxu0 0
    %619 = vmatpush2.bf16.msra.mxu0 0
    %620 = vmatprep.subr.bf16.mxu0 0
    %621 = vmatpush2.bf16.msra.mxu0 0
    %622 = vmatprep.subr.bf16.mxu0 0
    %623 = vmatpush2.bf16.msra.mxu0 0
    %624 = vmatprep.subr.bf16.mxu0 0
    %625 = vmatpush2.bf16.msra.mxu0 0
    %626 = vmatprep.subr.bf16.mxu0 0
    %627 = vmatpush2.bf16.msra.mxu0 0
    %628 = vmatprep.subr.bf16.mxu0 0
    %629 = vmatpush2.bf16.msra.mxu0 0
    %630 = vmatprep.mubr.bf16.mxu0 0
    %631 = vmatmul.mubr.bf16.gmra.mxu0 %v593
    %v632 = vpop.f32.mrf.mxu0
    %v633 = vadd.f32 0.0, %v632
    %v634 = vpop.f32.mrf.mxu0
    %v635 = vpop.f32.mrf.mxu0
    %v636 = vpop.f32.mrf.mxu0
    %637 = vdwg.mxu0
    %v638 = vpack.c.bf16 %v633, %v585
    %v640 = vsel %vm198, %v638, 0
    %v643 = vsel %vm323, %v192, 0
    %645 = vmatprep.subr.bf16.mxu0 0
    %646 = vmatpush1.bf16.msra.mxu0 0
    %647 = vmatprep.subr.bf16.mxu0 0
    %648 = vmatpush1.bf16.msra.mxu0 0
    %649 = vmatprep.subr.bf16.mxu0 0
    %650 = vmatpush1.bf16.msra.mxu0 0
    %651 = vmatprep.subr.bf16.mxu0 0
    %652 = vmatpush1.bf16.msra.mxu0 0
    %653 = vmatprep.subr.bf16.mxu0 0
    %654 = vmatpush1.bf16.msra.mxu0 0
    %655 = vmatprep.subr.bf16.mxu0 0
    %656 = vmatpush1.bf16.msra.mxu0 0
    %657 = vmatprep.subr.bf16.mxu0 0
    %658 = vmatpush1.bf16.msra.mxu0 0
    %659 = vmatprep.subr.bf16.mxu0 0
    %660 = vmatpush1.bf16.msra.mxu0 %v643
    %661 = vmatprep.subr.bf16.mxu0 0
    %662 = vmatpush2.bf16.msra.mxu0 0
    %663 = vmatprep.subr.bf16.mxu0 0
    %664 = vmatpush2.bf16.msra.mxu0 0
    %665 = vmatprep.subr.bf16.mxu0 0
    %666 = vmatpush2.bf16.msra.mxu0 0
    %667 = vmatprep.subr.bf16.mxu0 0
    %668 = vmatpush2.bf16.msra.mxu0 0
    %669 = vmatprep.subr.bf16.mxu0 0
    %670 = vmatpush2.bf16.msra.mxu0 0
    %671 = vmatprep.subr.bf16.mxu0 0
    %672 = vmatpush2.bf16.msra.mxu0 0
    %673 = vmatprep.subr.bf16.mxu0 0
    %674 = vmatpush2.bf16.msra.mxu0 0
    %675 = vmatprep.subr.bf16.mxu0 0
    %676 = vmatpush2.bf16.msra.mxu0 0
    %677 = vmatprep.mubr.bf16.mxu0 0
    %678 = vmatmul.mubr.bf16.gmra.mxu0 %v640
    %v679 = vpop.f32.mrf.mxu0
    %v680 = vadd.f32 0.0, %v679
    %v681 = vpop.f32.mrf.mxu0
    %v682 = vpop.f32.mrf.mxu0
    %v683 = vadd.f32 0.0, %v682
    %v684 = vpop.f32.mrf.mxu0
    %685 = vdwg.mxu0
    %v687 = vsel %vm198, %v415, 0
    %v690 = vsel %vm323, %v191, 0
    %692 = vmatprep.subr.bf16.mxu0 0
    %693 = vmatpush1.bf16.msra.mxu0 0
    %694 = vmatprep.subr.bf16.mxu0 0
    %695 = vmatpush1.bf16.msra.mxu0 0
    %696 = vmatprep.subr.bf16.mxu0 0
    %697 = vmatpush1.bf16.msra.mxu0 0
    %698 = vmatprep.subr.bf16.mxu0 0
    %699 = vmatpush1.bf16.msra.mxu0 0
    %700 = vmatprep.subr.bf16.mxu0 0
    %701 = vmatpush1.bf16.msra.mxu0 0
    %702 = vmatprep.subr.bf16.mxu0 0
    %703 = vmatpush1.bf16.msra.mxu0 0
    %704 = vmatprep.subr.bf16.mxu0 0
    %705 = vmatpush1.bf16.msra.mxu0 0
    %706 = vmatprep.subr.bf16.mxu0 0
    %707 = vmatpush1.bf16.msra.mxu0 %v690
    %708 = vmatprep.subr.bf16.mxu0 0
    %709 = vmatpush2.bf16.msra.mxu0 0
    %710 = vmatprep.subr.bf16.mxu0 0
    %711 = vmatpush2.bf16.msra.mxu0 0
    %712 = vmatprep.subr.bf16.mxu0 0
    %713 = vmatpush2.bf16.msra.mxu0 0
    %714 = vmatprep.subr.bf16.mxu0 0
    %715 = vmatpush2.bf16.msra.mxu0 0
    %716 = vmatprep.subr.bf16.mxu0 0
    %717 = vmatpush2.bf16.msra.mxu0 0
    %718 = vmatprep.subr.bf16.mxu0 0
    %719 = vmatpush2.bf16.msra.mxu0 0
    %720 = vmatprep.subr.bf16.mxu0 0
    %721 = vmatpush2.bf16.msra.mxu0 0
    %722 = vmatprep.subr.bf16.mxu0 0
    %723 = vmatpush2.bf16.msra.mxu0 0
    %724 = vmatprep.mubr.bf16.mxu0 0
    %725 = vmatmul.mubr.bf16.gmra.mxu0 %v687
    %v726 = vpop.f32.mrf.mxu0
    %v727 = vadd.f32 %v680, %v726
    %v728 = vpop.f32.mrf.mxu0
    %v729 = vpop.f32.mrf.mxu0
    %v730 = vadd.f32 %v683, %v729
    %v731 = vpop.f32.mrf.mxu0
    %732 = vdwg.mxu0
    %733 = vrot.lane.b32.xlu0 %v187, 112
    %v734 = vpop.permute.xlu0 %733
    %735 = vrot.lane.b32.xlu0 %v189, 80
    %v736 = vpop.permute.xlu0 %735
    %v738 = vsel %vm198, %v734, 0
    %v741 = vsel %vm198, %v736, 0
    %743 = vmatprep.subr.bf16.mxu0 0
    %744 = vmatpush1.bf16.xpose.msra.mxu0 0
    %745 = vmatprep.subr.bf16.mxu0 0
    %746 = vmatpush1.bf16.xpose.msra.mxu0 0
    %747 = vmatprep.subr.bf16.mxu0 0
    %748 = vmatpush1.bf16.xpose.msra.mxu0 0
    %749 = vmatprep.subr.bf16.mxu0 0
    %750 = vmatpush1.bf16.xpose.msra.mxu0 0
    %751 = vmatprep.subr.bf16.mxu0 0
    %752 = vmatpush1.bf16.xpose.msra.mxu0 0
    %753 = vmatprep.subr.bf16.mxu0 0
    %754 = vmatpush1.bf16.xpose.msra.mxu0 0
    %755 = vmatprep.subr.bf16.mxu0 0
    %756 = vmatpush1.bf16.xpose.msra.mxu0 0
    %757 = vmatprep.subr.bf16.mxu0 0
    %758 = vmatpush1.bf16.xpose.msra.mxu0 %v741
    %759 = vmatprep.subr.bf16.mxu0 0
    %760 = vmatpush2.bf16.xpose.msra.mxu0 0
    %761 = vmatprep.subr.bf16.mxu0 0
    %762 = vmatpush2.bf16.xpose.msra.mxu0 0
    %763 = vmatprep.subr.bf16.mxu0 0
    %764 = vmatpush2.bf16.xpose.msra.mxu0 0
    %765 = vmatprep.subr.bf16.mxu0 0
    %766 = vmatpush2.bf16.xpose.msra.mxu0 0
    %767 = vmatprep.subr.bf16.mxu0 0
    %768 = vmatpush2.bf16.xpose.msra.mxu0 0
    %769 = vmatprep.subr.bf16.mxu0 0
    %770 = vmatpush2.bf16.xpose.msra.mxu0 0
    %771 = vmatprep.subr.bf16.mxu0 0
    %772 = vmatpush2.bf16.xpose.msra.mxu0 0
    %773 = vmatprep.subr.bf16.mxu0 0
    %774 = vmatpush2.bf16.xpose.msra.mxu0 0
    %775 = vmatprep.mubr.bf16.mxu0 0
    %776 = vmatmul.mubr.bf16.gmra.mxu0 %v738
    %v777 = vpop.f32.mrf.mxu0
    %v778 = vadd.f32 0.0, %v777
    %v779 = vpop.f32.mrf.mxu0
    %v780 = vpop.f32.mrf.mxu0
    %v781 = vpop.f32.mrf.mxu0
    %782 = vdwg.mxu0
    %783 = vrot.lane.b32.xlu0 %v188, 112
    %v784 = vpop.permute.xlu0 %783
    %785 = vrot.lane.b32.xlu0 %v190, 80
    %v786 = vpop.permute.xlu0 %785
    %v788 = vsel %vm198, %v784, 0
    %v791 = vsel %vm198, %v786, 0
    %793 = vmatprep.subr.bf16.mxu0 0
    %794 = vmatpush1.bf16.xpose.msra.mxu0 0
    %795 = vmatprep.subr.bf16.mxu0 0
    %796 = vmatpush1.bf16.xpose.msra.mxu0 0
    %797 = vmatprep.subr.bf16.mxu0 0
    %798 = vmatpush1.bf16.xpose.msra.mxu0 0
    %799 = vmatprep.subr.bf16.mxu0 0
    %800 = vmatpush1.bf16.xpose.msra.mxu0 0
    %801 = vmatprep.subr.bf16.mxu0 0
    %802 = vmatpush1.bf16.xpose.msra.mxu0 0
    %803 = vmatprep.subr.bf16.mxu0 0
    %804 = vmatpush1.bf16.xpose.msra.mxu0 0
    %805 = vmatprep.subr.bf16.mxu0 0
    %806 = vmatpush1.bf16.xpose.msra.mxu0 0
    %807 = vmatprep.subr.bf16.mxu0 0
    %808 = vmatpush1.bf16.xpose.msra.mxu0 %v791
    %809 = vmatprep.subr.bf16.mxu0 0
    %810 = vmatpush2.bf16.xpose.msra.mxu0 0
    %811 = vmatprep.subr.bf16.mxu0 0
    %812 = vmatpush2.bf16.xpose.msra.mxu0 0
    %813 = vmatprep.subr.bf16.mxu0 0
    %814 = vmatpush2.bf16.xpose.msra.mxu0 0
    %815 = vmatprep.subr.bf16.mxu0 0
    %816 = vmatpush2.bf16.xpose.msra.mxu0 0
    %817 = vmatprep.subr.bf16.mxu0 0
    %818 = vmatpush2.bf16.xpose.msra.mxu0 0
    %819 = vmatprep.subr.bf16.mxu0 0
    %820 = vmatpush2.bf16.xpose.msra.mxu0 0
    %821 = vmatprep.subr.bf16.mxu0 0
    %822 = vmatpush2.bf16.xpose.msra.mxu0 0
    %823 = vmatprep.subr.bf16.mxu0 0
    %824 = vmatpush2.bf16.xpose.msra.mxu0 0
    %825 = vmatprep.mubr.bf16.mxu0 0
    %826 = vmatmul.mubr.bf16.gmra.mxu0 %v788
    %v827 = vpop.f32.mrf.mxu0
    %v828 = vadd.f32 0.0, %v827
    %v829 = vpop.f32.mrf.mxu0
    %v830 = vpop.f32.mrf.mxu0
    %v831 = vpop.f32.mrf.mxu0
    %832 = vdwg.mxu0
    %v833 = vsel %vm198, %v778, -inf
    %834 = vmax.xlane.f32.xlu0 %v833
    %v835 = vpop.xlane.xlu0 %834
    %v836 = vsel %vm198, %v828, -inf
    %837 = vmax.xlane.f32.xlu0 %v836
    %v838 = vpop.xlane.xlu0 %837
    %v839 = vsub.f32 %v778, %v835
    %v840 = vsub.f32 %v828, %v838
    %v841 = vmul.f32 %v839, 1.442695
    %v842 = vpow.pop %v841
    %v843 = vmul.f32 %v840, 1.442695
    %v844 = vpow.pop %v843
    %v845 = vsel %vm198, %v842, 0.0
    %846 = vadd.xlane.f32.xlu0 %v845
    %v847 = vpop.xlane.xlu0 %846
    %v848 = vsel %vm198, %v844, 0.0
    %849 = vadd.xlane.f32.xlu0 %v848
    %v850 = vpop.xlane.xlu0 %849
    %v851 = vrcp.pop %v847
    %v852 = vrcp.pop %v850
    %v853 = vmul.f32 %v842, %v851
    %v854 = vmul.f32 %v844, %v852
    %v855 = vpack.c.bf16 %v853, %v853
    %v856 = vpack.c.bf16 %v854, %v854
    %857 = vrot.lane.b32.xlu0 %v189, 48
    %v858 = vpop.permute.xlu0 %857
    %v860 = vsel %vm198, %v855, 0
    %v863 = vsel %vm323, %v858, 0
    %865 = vmatprep.subr.bf16.mxu0 0
    %866 = vmatpush1.bf16.msra.mxu0 0
    %867 = vmatprep.subr.bf16.mxu0 0
    %868 = vmatpush1.bf16.msra.mxu0 0
    %869 = vmatprep.subr.bf16.mxu0 0
    %870 = vmatpush1.bf16.msra.mxu0 0
    %871 = vmatprep.subr.bf16.mxu0 0
    %872 = vmatpush1.bf16.msra.mxu0 0
    %873 = vmatprep.subr.bf16.mxu0 0
    %874 = vmatpush1.bf16.msra.mxu0 0
    %875 = vmatprep.subr.bf16.mxu0 0
    %876 = vmatpush1.bf16.msra.mxu0 0
    %877 = vmatprep.subr.bf16.mxu0 0
    %878 = vmatpush1.bf16.msra.mxu0 0
    %879 = vmatprep.subr.bf16.mxu0 0
    %880 = vmatpush1.bf16.msra.mxu0 %v863
    %881 = vmatprep.subr.bf16.mxu0 0
    %882 = vmatpush2.bf16.msra.mxu0 0
    %883 = vmatprep.subr.bf16.mxu0 0
    %884 = vmatpush2.bf16.msra.mxu0 0
    %885 = vmatprep.subr.bf16.mxu0 0
    %886 = vmatpush2.bf16.msra.mxu0 0
    %887 = vmatprep.subr.bf16.mxu0 0
    %888 = vmatpush2.bf16.msra.mxu0 0
    %889 = vmatprep.subr.bf16.mxu0 0
    %890 = vmatpush2.bf16.msra.mxu0 0
    %891 = vmatprep.subr.bf16.mxu0 0
    %892 = vmatpush2.bf16.msra.mxu0 0
    %893 = vmatprep.subr.bf16.mxu0 0
    %894 = vmatpush2.bf16.msra.mxu0 0
    %895 = vmatprep.subr.bf16.mxu0 0
    %896 = vmatpush2.bf16.msra.mxu0 0
    %897 = vmatprep.mubr.bf16.mxu0 0
    %898 = vmatmul.mubr.bf16.gmra.mxu0 %v860
    %v899 = vpop.f32.mrf.mxu0
    %v900 = vadd.f32 0.0, %v899
    %v901 = vpop.f32.mrf.mxu0
    %v902 = vpop.f32.mrf.mxu0
    %v903 = vpop.f32.mrf.mxu0
    %904 = vdwg.mxu0
    %905 = vrot.lane.b32.xlu0 %v190, 48
    %v906 = vpop.permute.xlu0 %905
    %v908 = vsel %vm198, %v856, 0
    %v911 = vsel %vm323, %v906, 0
    %913 = vmatprep.subr.bf16.mxu0 0
    %914 = vmatpush1.bf16.msra.mxu0 0
    %915 = vmatprep.subr.bf16.mxu0 0
    %916 = vmatpush1.bf16.msra.mxu0 0
    %917 = vmatprep.subr.bf16.mxu0 0
    %918 = vmatpush1.bf16.msra.mxu0 0
    %919 = vmatprep.subr.bf16.mxu0 0
    %920 = vmatpush1.bf16.msra.mxu0 0
    %921 = vmatprep.subr.bf16.mxu0 0
    %922 = vmatpush1.bf16.msra.mxu0 0
    %923 = vmatprep.subr.bf16.mxu0 0
    %924 = vmatpush1.bf16.msra.mxu0 0
    %925 = vmatprep.subr.bf16.mxu0 0
    %926 = vmatpush1.bf16.msra.mxu0 0
    %927 = vmatprep.subr.bf16.mxu0 0
    %928 = vmatpush1.bf16.msra.mxu0 %v911
    %929 = vmatprep.subr.bf16.mxu0 0
    %930 = vmatpush2.bf16.msra.mxu0 0
    %931 = vmatprep.subr.bf16.mxu0 0
    %932 = vmatpush2.bf16.msra.mxu0 0
    %933 = vmatprep.subr.bf16.mxu0 0
    %934 = vmatpush2.bf16.msra.mxu0 0
    %935 = vmatprep.subr.bf16.mxu0 0
    %936 = vmatpush2.bf16.msra.mxu0 0
    %937 = vmatprep.subr.bf16.mxu0 0
    %938 = vmatpush2.bf16.msra.mxu0 0
    %939 = vmatprep.subr.bf16.mxu0 0
    %940 = vmatpush2.bf16.msra.mxu0 0
    %941 = vmatprep.subr.bf16.mxu0 0
    %942 = vmatpush2.bf16.msra.mxu0 0
    %943 = vmatprep.subr.bf16.mxu0 0
    %944 = vmatpush2.bf16.msra.mxu0 0
    %945 = vmatprep.mubr.bf16.mxu0 0
    %946 = vmatmul.mubr.bf16.gmra.mxu0 %v908
    %v947 = vpop.f32.mrf.mxu0
    %v948 = vadd.f32 0.0, %v947
    %v949 = vpop.f32.mrf.mxu0
    %v950 = vpop.f32.mrf.mxu0
    %v951 = vpop.f32.mrf.mxu0
    %952 = vdwg.mxu0
    %v953 = vpack.c.bf16 %v948, %v900
    %v955 = vsel %vm198, %v953, 0
    %v958 = vsel %vm323, %v193, 0
    %960 = vmatprep.subr.bf16.mxu0 0
    %961 = vmatpush1.bf16.msra.mxu0 0
    %962 = vmatprep.subr.bf16.mxu0 0
    %963 = vmatpush1.bf16.msra.mxu0 0
    %964 = vmatprep.subr.bf16.mxu0 0
    %965 = vmatpush1.bf16.msra.mxu0 0
    %966 = vmatprep.subr.bf16.mxu0 0
    %967 = vmatpush1.bf16.msra.mxu0 0
    %968 = vmatprep.subr.bf16.mxu0 0
    %969 = vmatpush1.bf16.msra.mxu0 0
    %970 = vmatprep.subr.bf16.mxu0 0
    %971 = vmatpush1.bf16.msra.mxu0 0
    %972 = vmatprep.subr.bf16.mxu0 0
    %973 = vmatpush1.bf16.msra.mxu0 0
    %974 = vmatprep.subr.bf16.mxu0 0
    %975 = vmatpush1.bf16.msra.mxu0 %v958
    %976 = vmatprep.subr.bf16.mxu0 0
    %977 = vmatpush2.bf16.msra.mxu0 0
    %978 = vmatprep.subr.bf16.mxu0 0
    %979 = vmatpush2.bf16.msra.mxu0 0
    %980 = vmatprep.subr.bf16.mxu0 0
    %981 = vmatpush2.bf16.msra.mxu0 0
    %982 = vmatprep.subr.bf16.mxu0 0
    %983 = vmatpush2.bf16.msra.mxu0 0
    %984 = vmatprep.subr.bf16.mxu0 0
    %985 = vmatpush2.bf16.msra.mxu0 0
    %986 = vmatprep.subr.bf16.mxu0 0
    %987 = vmatpush2.bf16.msra.mxu0 0
    %988 = vmatprep.subr.bf16.mxu0 0
    %989 = vmatpush2.bf16.msra.mxu0 0
    %990 = vmatprep.subr.bf16.mxu0 0
    %991 = vmatpush2.bf16.msra.mxu0 0
    %992 = vmatprep.mubr.bf16.mxu0 0
    %993 = vmatmul.mubr.bf16.gmra.mxu0 %v955
    %v994 = vpop.f32.mrf.mxu0
    %v995 = vadd.f32 0.0, %v994
    %v996 = vpop.f32.mrf.mxu0
    %v997 = vpop.f32.mrf.mxu0
    %v998 = vadd.f32 0.0, %v997
    %v999 = vpop.f32.mrf.mxu0
    %1000 = vdwg.mxu0
    %v1001 = vadd.f32 %v727, %v995
    %v1002 = vadd.f32 %v730, %v998
    %1003 = vrot.lane.b32.xlu0 %v187, 104
    %v1004 = vpop.permute.xlu0 %1003
    %1005 = vrot.lane.b32.xlu0 %v189, 72
    %v1006 = vpop.permute.xlu0 %1005
    %v1008 = vsel %vm198, %v1004, 0
    %v1011 = vsel %vm198, %v1006, 0
    %1013 = vmatprep.subr.bf16.mxu0 0
    %1014 = vmatpush1.bf16.xpose.msra.mxu0 0
    %1015 = vmatprep.subr.bf16.mxu0 0
    %1016 = vmatpush1.bf16.xpose.msra.mxu0 0
    %1017 = vmatprep.subr.bf16.mxu0 0
    %1018 = vmatpush1.bf16.xpose.msra.mxu0 0
    %1019 = vmatprep.subr.bf16.mxu0 0
    %1020 = vmatpush1.bf16.xpose.msra.mxu0 0
    %1021 = vmatprep.subr.bf16.mxu0 0
    %1022 = vmatpush1.bf16.xpose.msra.mxu0 0
    %1023 = vmatprep.subr.bf16.mxu0 0
    %1024 = vmatpush1.bf16.xpose.msra.mxu0 0
    %1025 = vmatprep.subr.bf16.mxu0 0
    %1026 = vmatpush1.bf16.xpose.msra.mxu0 0
    %1027 = vmatprep.subr.bf16.mxu0 0
    %1028 = vmatpush1.bf16.xpose.msra.mxu0 %v1011
    %1029 = vmatprep.subr.bf16.mxu0 0
    %1030 = vmatpush2.bf16.xpose.msra.mxu0 0
    %1031 = vmatprep.subr.bf16.mxu0 0
    %1032 = vmatpush2.bf16.xpose.msra.mxu0 0
    %1033 = vmatprep.subr.bf16.mxu0 0
    %1034 = vmatpush2.bf16.xpose.msra.mxu0 0
    %1035 = vmatprep.subr.bf16.mxu0 0
    %1036 = vmatpush2.bf16.xpose.msra.mxu0 0
    %1037 = vmatprep.subr.bf16.mxu0 0
    %1038 = vmatpush2.bf16.xpose.msra.mxu0 0
    %1039 = vmatprep.subr.bf16.mxu0 0
    %1040 = vmatpush2.bf16.xpose.msra.mxu0 0
    %1041 = vmatprep.subr.bf16.mxu0 0
    %1042 = vmatpush2.bf16.xpose.msra.mxu0 0
    %1043 = vmatprep.subr.bf16.mxu0 0
    %1044 = vmatpush2.bf16.xpose.msra.mxu0 0
    %1045 = vmatprep.mubr.bf16.mxu0 0
    %1046 = vmatmul.mubr.bf16.gmra.mxu0 %v1008
    %v1047 = vpop.f32.mrf.mxu0
    %v1048 = vadd.f32 0.0, %v1047
    %v1049 = vpop.f32.mrf.mxu0
    %v1050 = vpop.f32.mrf.mxu0
    %v1051 = vpop.f32.mrf.mxu0
    %1052 = vdwg.mxu0
    %1053 = vrot.lane.b32.xlu0 %v188, 104
    %v1054 = vpop.permute.xlu0 %1053
    %1055 = vrot.lane.b32.xlu0 %v190, 72
    %v1056 = vpop.permute.xlu0 %1055
    %v1058 = vsel %vm198, %v1054, 0
    %v1061 = vsel %vm198, %v1056, 0
    %1063 = vmatprep.subr.bf16.mxu0 0
    %1064 = vmatpush1.bf16.xpose.msra.mxu0 0
    %1065 = vmatprep.subr.bf16.mxu0 0
    %1066 = vmatpush1.bf16.xpose.msra.mxu0 0
    %1067 = vmatprep.subr.bf16.mxu0 0
    %1068 = vmatpush1.bf16.xpose.msra.mxu0 0
    %1069 = vmatprep.subr.bf16.mxu0 0
    %1070 = vmatpush1.bf16.xpose.msra.mxu0 0
    %1071 = vmatprep.subr.bf16.mxu0 0
    %1072 = vmatpush1.bf16.xpose.msra.mxu0 0
    %1073 = vmatprep.subr.bf16.mxu0 0
    %1074 = vmatpush1.bf16.xpose.msra.mxu0 0
    %1075 = vmatprep.subr.bf16.mxu0 0
    %1076 = vmatpush1.bf16.xpose.msra.mxu0 0
    %1077 = vmatprep.subr.bf16.mxu0 0
    %1078 = vmatpush1.bf16.xpose.msra.mxu0 %v1061
    %1079 = vmatprep.subr.bf16.mxu0 0
    %1080 = vmatpush2.bf16.xpose.msra.mxu0 0
    %1081 = vmatprep.subr.bf16.mxu0 0
    %1082 = vmatpush2.bf16.xpose.msra.mxu0 0
    %1083 = vmatprep.subr.bf16.mxu0 0
    %1084 = vmatpush2.bf16.xpose.msra.mxu0 0
    %1085 = vmatprep.subr.bf16.mxu0 0
    %1086 = vmatpush2.bf16.xpose.msra.mxu0 0
    %1087 = vmatprep.subr.bf16.mxu0 0
    %1088 = vmatpush2.bf16.xpose.msra.mxu0 0
    %1089 = vmatprep.subr.bf16.mxu0 0
    %1090 = vmatpush2.bf16.xpose.msra.mxu0 0
    %1091 = vmatprep.subr.bf16.mxu0 0
    %1092 = vmatpush2.bf16.xpose.msra.mxu0 0
    %1093 = vmatprep.subr.bf16.mxu0 0
    %1094 = vmatpush2.bf16.xpose.msra.mxu0 0
    %1095 = vmatprep.mubr.bf16.mxu0 0
    %1096 = vmatmul.mubr.bf16.gmra.mxu0 %v1058
    %v1097 = vpop.f32.mrf.mxu0
    %v1098 = vadd.f32 0.0, %v1097
    %v1099 = vpop.f32.mrf.mxu0
    %v1100 = vpop.f32.mrf.mxu0
    %v1101 = vpop.f32.mrf.mxu0
    %1102 = vdwg.mxu0
    %v1103 = vsel %vm198, %v1048, -inf
    %1104 = vmax.xlane.f32.xlu0 %v1103
    %v1105 = vpop.xlane.xlu0 %1104
    %v1106 = vsel %vm198, %v1098, -inf
    %1107 = vmax.xlane.f32.xlu0 %v1106
    %v1108 = vpop.xlane.xlu0 %1107
    %v1109 = vsub.f32 %v1048, %v1105
    %v1110 = vsub.f32 %v1098, %v1108
    %v1111 = vmul.f32 %v1109, 1.442695
    %v1112 = vpow.pop %v1111
    %v1113 = vmul.f32 %v1110, 1.442695
    %v1114 = vpow.pop %v1113
    %v1115 = vsel %vm198, %v1112, 0.0
    %1116 = vadd.xlane.f32.xlu0 %v1115
    %v1117 = vpop.xlane.xlu0 %1116
    %v1118 = vsel %vm198, %v1114, 0.0
    %1119 = vadd.xlane.f32.xlu0 %v1118
    %v1120 = vpop.xlane.xlu0 %1119
    %v1121 = vrcp.pop %v1117
    %v1122 = vrcp.pop %v1120
    %v1123 = vmul.f32 %v1112, %v1121
    %v1124 = vmul.f32 %v1114, %v1122
    %v1125 = vpack.c.bf16 %v1123, %v1123
    %v1126 = vpack.c.bf16 %v1124, %v1124
    %1127 = vrot.lane.b32.xlu0 %v189, 40
    %v1128 = vpop.permute.xlu0 %1127
    %v1130 = vsel %vm198, %v1125, 0
    %v1133 = vsel %vm323, %v1128, 0
    %1135 = vmatprep.subr.bf16.mxu0 0
    %1136 = vmatpush1.bf16.msra.mxu0 0
    %1137 = vmatprep.subr.bf16.mxu0 0
    %1138 = vmatpush1.bf16.msra.mxu0 0
    %1139 = vmatprep.subr.bf16.mxu0 0
    %1140 = vmatpush1.bf16.msra.mxu0 0
    %1141 = vmatprep.subr.bf16.mxu0 0
    %1142 = vmatpush1.bf16.msra.mxu0 0
    %1143 = vmatprep.subr.bf16.mxu0 0
    %1144 = vmatpush1.bf16.msra.mxu0 0
    %1145 = vmatprep.subr.bf16.mxu0 0
    %1146 = vmatpush1.bf16.msra.mxu0 0
    %1147 = vmatprep.subr.bf16.mxu0 0
    %1148 = vmatpush1.bf16.msra.mxu0 0
    %1149 = vmatprep.subr.bf16.mxu0 0
    %1150 = vmatpush1.bf16.msra.mxu0 %v1133
    %1151 = vmatprep.subr.bf16.mxu0 0
    %1152 = vmatpush2.bf16.msra.mxu0 0
    %1153 = vmatprep.subr.bf16.mxu0 0
    %1154 = vmatpush2.bf16.msra.mxu0 0
    %1155 = vmatprep.subr.bf16.mxu0 0
    %1156 = vmatpush2.bf16.msra.mxu0 0
    %1157 = vmatprep.subr.bf16.mxu0 0
    %1158 = vmatpush2.bf16.msra.mxu0 0
    %1159 = vmatprep.subr.bf16.mxu0 0
    %1160 = vmatpush2.bf16.msra.mxu0 0
    %1161 = vmatprep.subr.bf16.mxu0 0
    %1162 = vmatpush2.bf16.msra.mxu0 0
    %1163 = vmatprep.subr.bf16.mxu0 0
    %1164 = vmatpush2.bf16.msra.mxu0 0
    %1165 = vmatprep.subr.bf16.mxu0 0
    %1166 = vmatpush2.bf16.msra.mxu0 0
    %1167 = vmatprep.mubr.bf16.mxu0 0
    %1168 = vmatmul.mubr.bf16.gmra.mxu0 %v1130
    %v1169 = vpop.f32.mrf.mxu0
    %v1170 = vadd.f32 0.0, %v1169
    %v1171 = vpop.f32.mrf.mxu0
    %v1172 = vpop.f32.mrf.mxu0
    %v1173 = vpop.f32.mrf.mxu0
    %1174 = vdwg.mxu0
    %1175 = vrot.lane.b32.xlu0 %v190, 40
    %v1176 = vpop.permute.xlu0 %1175
    %v1178 = vsel %vm198, %v1126, 0
    %v1181 = vsel %vm323, %v1176, 0
    %1183 = vmatprep.subr.bf16.mxu0 0
    %1184 = vmatpush1.bf16.msra.mxu0 0
    %1185 = vmatprep.subr.bf16.mxu0 0
    %1186 = vmatpush1.bf16.msra.mxu0 0
    %1187 = vmatprep.subr.bf16.mxu0 0
    %1188 = vmatpush1.bf16.msra.mxu0 0
    %1189 = vmatprep.subr.bf16.mxu0 0
    %1190 = vmatpush1.bf16.msra.mxu0 0
    %1191 = vmatprep.subr.bf16.mxu0 0
    %1192 = vmatpush1.bf16.msra.mxu0 0
    %1193 = vmatprep.subr.bf16.mxu0 0
    %1194 = vmatpush1.bf16.msra.mxu0 0
    %1195 = vmatprep.subr.bf16.mxu0 0
    %1196 = vmatpush1.bf16.msra.mxu0 0
    %1197 = vmatprep.subr.bf16.mxu0 0
    %1198 = vmatpush1.bf16.msra.mxu0 %v1181
    %1199 = vmatprep.subr.bf16.mxu0 0
    %1200 = vmatpush2.bf16.msra.mxu0 0
    %1201 = vmatprep.subr.bf16.mxu0 0
    %1202 = vmatpush2.bf16.msra.mxu0 0
    %1203 = vmatprep.subr.bf16.mxu0 0
    %1204 = vmatpush2.bf16.msra.mxu0 0
    %1205 = vmatprep.subr.bf16.mxu0 0
    %1206 = vmatpush2.bf16.msra.mxu0 0
    %1207 = vmatprep.subr.bf16.mxu0 0
    %1208 = vmatpush2.bf16.msra.mxu0 0
    %1209 = vmatprep.subr.bf16.mxu0 0
    %1210 = vmatpush2.bf16.msra.mxu0 0
    %1211 = vmatprep.subr.bf16.mxu0 0
    %1212 = vmatpush2.bf16.msra.mxu0 0
    %1213 = vmatprep.subr.bf16.mxu0 0
    %1214 = vmatpush2.bf16.msra.mxu0 0
    %1215 = vmatprep.mubr.bf16.mxu0 0
    %1216 = vmatmul.mubr.bf16.gmra.mxu0 %v1178
    %v1217 = vpop.f32.mrf.mxu0
    %v1218 = vadd.f32 0.0, %v1217
    %v1219 = vpop.f32.mrf.mxu0
    %v1220 = vpop.f32.mrf.mxu0
    %v1221 = vpop.f32.mrf.mxu0
    %1222 = vdwg.mxu0
    %v1223 = vpack.c.bf16 %v1218, %v1170
    %v1225 = vsel %vm198, %v1223, 0
    %v1228 = vsel %vm323, %v194, 0
    %1230 = vmatprep.subr.bf16.mxu0 0
    %1231 = vmatpush1.bf16.msra.mxu0 0
    %1232 = vmatprep.subr.bf16.mxu0 0
    %1233 = vmatpush1.bf16.msra.mxu0 0
    %1234 = vmatprep.subr.bf16.mxu0 0
    %1235 = vmatpush1.bf16.msra.mxu0 0
    %1236 = vmatprep.subr.bf16.mxu0 0
    %1237 = vmatpush1.bf16.msra.mxu0 0
    %1238 = vmatprep.subr.bf16.mxu0 0
    %1239 = vmatpush1.bf16.msra.mxu0 0
    %1240 = vmatprep.subr.bf16.mxu0 0
    %1241 = vmatpush1.bf16.msra.mxu0 0
    %1242 = vmatprep.subr.bf16.mxu0 0
    %1243 = vmatpush1.bf16.msra.mxu0 0
    %1244 = vmatprep.subr.bf16.mxu0 0
    %1245 = vmatpush1.bf16.msra.mxu0 %v1228
    %1246 = vmatprep.subr.bf16.mxu0 0
    %1247 = vmatpush2.bf16.msra.mxu0 0
    %1248 = vmatprep.subr.bf16.mxu0 0
    %1249 = vmatpush2.bf16.msra.mxu0 0
    %1250 = vmatprep.subr.bf16.mxu0 0
    %1251 = vmatpush2.bf16.msra.mxu0 0
    %1252 = vmatprep.subr.bf16.mxu0 0
    %1253 = vmatpush2.bf16.msra.mxu0 0
    %1254 = vmatprep.subr.bf16.mxu0 0
    %1255 = vmatpush2.bf16.msra.mxu0 0
    %1256 = vmatprep.subr.bf16.mxu0 0
    %1257 = vmatpush2.bf16.msra.mxu0 0
    %1258 = vmatprep.subr.bf16.mxu0 0
    %1259 = vmatpush2.bf16.msra.mxu0 0
    %1260 = vmatprep.subr.bf16.mxu0 0
    %1261 = vmatpush2.bf16.msra.mxu0 0
    %1262 = vmatprep.mubr.bf16.mxu0 0
    %1263 = vmatmul.mubr.bf16.gmra.mxu0 %v1225
    %v1264 = vpop.f32.mrf.mxu0
    %v1265 = vadd.f32 0.0, %v1264
    %v1266 = vpop.f32.mrf.mxu0
    %v1267 = vpop.f32.mrf.mxu0
    %v1268 = vadd.f32 0.0, %v1267
    %v1269 = vpop.f32.mrf.mxu0
    %1270 = vdwg.mxu0
    %v1271 = vadd.f32 %v1001, %v1265
    %v1272 = vadd.f32 %v1002, %v1268
    %v1273 = vld [vmem:[%s6] sm:$0x1]
    %v1275 = vlaneseq
    %v1276 = vshrl.u32 %v1275, 7
    %v1277 = vsub.s32 0, %v1276
    %v1278 = vrot.slane %v1273, %v1277
    %v1280 = vadd.f32 %v1271, %v1278
    %v1281 = vadd.f32 %v1272, %v1278
    %v1282 = vadd.f32 %v69, %v1280
    %v1283 = vadd.f32 %v70, %v1281
    %1284 = vst.msk [vmem:[#allocation8] sm:$0xff] %vm71, %v1282
    %1285 = vst.msk [vmem:[#allocation8 + $0x8] sm:$0xff] %vm71, %v1283
    // Predicated region
    $region42: #{tpu_custom_call.1} parent=1 // pred_check
      _
    $region43: #{tpu_custom_call.1} parent=1 // pred_check_branch
      %1287 = sbr.rel (0) target = $region45
    $region44: #{tpu_custom_call.1} parent=1 // pred_region
      %s1289 = ssub.s32 256, 256
      %1290 = vsyncadd [#allocation4], %s1289
      %s1291 = sshll.u32 [#allocation8], 4
      %s1292 = int_to_ptr.vmem [resolvable:$true] %s1291
      %1297 = dma.vmem_to_hbm [thread:$0]  %s1292, 256, %s7, [#allocation4], 128, 128, 8
    $region45: #{tpu_custom_call.1} parent=1 // pred_fallthru
      _
    // Predicated region
    $region46: #{tpu_custom_call.1} parent=1 // pred_check
      _
    $region47: #{tpu_custom_call.1} parent=1 // pred_check_branch
      %1299 = sbr.rel (0) target = $region49
    $region48: #{tpu_custom_call.1} parent=1 // pred_region
      %1300 = dma.done [#allocation4], 256
    $region49: #{tpu_custom_call.1} parent=1 // pred_fallthru
      _
    %1301 = vsyncpa [#allocation3], 1
    %1302 = vsyncpa [#allocation6], 1
    %1303 = vsyncpa [#allocation4], 1

</llo_original>
